<compile_context>
chip_gen: v7x
topology: tpu7x:2x2x1
jax: 0.10.0
libtpu: 0.0.40
codegen_flags: <defaults>
</compile_context>

<pallas_src>
import jax
import jax.numpy as jnp
from jax.experimental import pallas as pl
from jax.experimental.pallas import tpu as pltpu


def _round_up(x, m):
    return (x + m - 1) // m * m


# ----------------------------- fused kernel ---------------------------------

def _make_posterior_kernel(n_layers, kernel_size, dilation_rate, pad, T):
    """Kernel for grid=(B, n_layers): one WN layer per grid step."""
    K, L, P = kernel_size, n_layers, pad

    def _mm(a, w):
        # MXU matmul, f32 accumulation; operand cast to the weight storage
        # dtype (bf16 weights -> bf16 MXU passes, f32 weights -> plain f32).
        return jnp.dot(a.astype(w.dtype), w, preferred_element_type=jnp.float32)

    def kernel(lens_ref, dil_ref,                     # SMEM scalar prefetch: (B,), (L,)
               x_ref, noise_ref,                      # (1,T,Cin), (1,T,Cout)
               pre_w_ref, pre_b_ref,                  # (Cin,H), (1,H)
               in_wt_ref, in_bt_ref,                  # (1,K*H,H), (1,1,H)   tanh half
               in_ws_ref, in_bs_ref,                  # (1,K*H,H), (1,1,H)   sigmoid half
               res_w_ref, res_b_ref,                  # (1,H,H), (1,1,H)     (last layer unused)
               skip_w_ref, skip_bsum_ref,             # (1,H,H), (1,H) = sum_i skip_b[i]
               pm_w_ref, pm_b_ref,                    # (H,Cout), (1,Cout)   proj -> m
               plog_w_ref, plog_b_ref,                # (H,Cout), (1,Cout)   proj -> logs
               out_ref,                               # (1,T,3*Cout) = [z | m | logs]
               xpad, skip_scr):                       # VMEM scratch (Tp,H), (T,H)
        b = pl.program_id(0)
        l = pl.program_id(1)
        length = lens_ref[b]
        # 0/1 validity mask, rebuilt in-kernel (cheap (T,1) iota/compare).
        mask = (jax.lax.broadcasted_iota(jnp.int32, (T, 1), 0) < length
                ).astype(jnp.float32)                                        # (T,1)

        Tp, H = xpad.shape

        # ---- first layer of this batch element: pre-conv + scratch init ----
        @pl.when(l == 0)
        def _():
            x = (_mm(x_ref[0], pre_w_ref[...]) + pre_b_ref[...]) * mask       # (T,H)
            if P > 0:
                # Zero only the pad rows; the [P:P+T] body is overwritten below.
                xpad[0:P, :] = jnp.zeros((P, H), jnp.float32)
                xpad[P + T:Tp, :] = jnp.zeros((Tp - P - T, H), jnp.float32)
            xpad[P:P + T, :] = x
            skip_scr[...] = jnp.zeros_like(skip_scr)

        # ---- dilated conv taps fused into one deep matmul per gate half ----
        if dilation_rate == 1:
            # Static tap offsets; center tap (k=(K-1)/2) lands on aligned P.
            starts = [P - (K - 1) // 2 + k for k in range(K)]
        else:
            d = dil_ref[l]                              # dilation for this layer
            pad_l = d * ((K - 1) // 2)
            starts = [P - pad_l + k * d for k in range(K)]
        taps = [xpad[pl.ds(s, T), :] for s in starts]   # K x (T,H)
        xs = jnp.concatenate(taps, axis=-1).astype(in_wt_ref.dtype)  # (T, K*H), cast once

        acc_t = jnp.dot(xs, in_wt_ref[0], preferred_element_type=jnp.float32) + in_bt_ref[0]
        acc_s = jnp.dot(xs, in_ws_ref[0], preferred_element_type=jnp.float32) + in_bs_ref[0]
        # fused_add_tanh_sigmoid_multiply with g = 0 (gin_channels = 0)
        acts = jnp.tanh(acc_t) * jax.nn.sigmoid(acc_s)                        # (T,H) f32
        acts_c = acts.astype(res_w_ref.dtype)           # single cast, reused twice

        # residual update (the PyTorch last res_skip conv has no res half)
        @pl.when(l < L - 1)
        def _():
            res = (jnp.dot(acts_c, res_w_ref[0], preferred_element_type=jnp.float32)
                   + res_b_ref[0])
            xpad[P:P + T, :] = (xpad[P:P + T, :] + res) * mask

        # skip accumulation (biases summed host-side, added once at the end)
        skip_scr[...] = skip_scr[...] + jnp.dot(
            acts_c, skip_w_ref[0], preferred_element_type=jnp.float32)

        # ---- last layer: proj + sampling, single lane-dense output block ----
        @pl.when(l == L - 1)
        def _():
            out = (skip_scr[...] + skip_bsum_ref[...]) * mask                 # WN output
            out_c = out.astype(pm_w_ref.dtype)
            m = (jnp.dot(out_c, pm_w_ref[...], preferred_element_type=jnp.float32)
                 + pm_b_ref[...]) * mask
            logs = (jnp.dot(out_c, plog_w_ref[...], preferred_element_type=jnp.float32)
                    + plog_b_ref[...]) * mask
            z = (m + noise_ref[0].astype(jnp.float32) * jnp.exp(logs)) * mask
            out_ref[0] = jnp.concatenate([z, m, logs], axis=-1).astype(out_ref.dtype)

    return kernel


# ------------------------------ wrapper --------------------------------------

def posterior_encoder_forward(params, x, x_lengths, noise, cfg):
    """x: (B, in_channels, T); x_lengths: (B,) int; noise: (B, out_channels, T)
    (explicit stand-in for torch.randn_like).  Returns (z, m, logs, x_mask)
    in the PyTorch (B, C, T) / (B, 1, T) layout."""
    # TODO(synk): g conditioning (gin_channels > 0) is not implemented; the
    # reference module defaults to gin_channels=0 / g=None.
    # TODO(synk): for B == 1 on v7x, a second parallel axis over T halves
    # (with a receptive-field halo) would be needed to occupy both TensorCores.
    B, Cin, T0 = x.shape
    H, Cout = cfg["hidden_channels"], cfg["out_channels"]
    K, L, dr = cfg["kernel_size"], cfg["n_layers"], cfg["dilation_rate"]
    assert K % 2 == 1, "WN assumes odd kernel_size ('same' padding)"

    P_raw = (dr ** (L - 1)) * (K - 1) // 2           # max padding across layers
    P = _round_up(P_raw, 8) if P_raw > 0 else 0      # sublane-aligned residual window
    T = _round_up(T0, 8)                             # sublane-aligned time
    Tp = T + 2 * P

    to_btc = lambda a: jnp.transpose(a, (0, 2, 1))
    x_btc = to_btc(x)                                # (B,T0,Cin)
    n_btc = to_btc(noise)                            # (B,T0,Cout)
    if T != T0:
        x_btc = jnp.pad(x_btc, ((0, 0), (0, T - T0), (0, 0)))
        n_btc = jnp.pad(n_btc, ((0, 0), (0, T - T0), (0, 0)))
    lens = x_lengths.astype(jnp.int32)
    dil = jnp.asarray([dr ** i for i in range(L)], jnp.int32)   # per-layer dilation (SMEM)

    # Host-side weight prep: fuse the K conv taps into one (K*H, H) matmul per
    # gate half; pre-sum the skip biases.
    in_wt = params["in_wt"].reshape(L, K * H, H)
    in_ws = params["in_ws"].reshape(L, K * H, H)
    skip_b_sum = params["skip_b"].astype(jnp.float32).sum(axis=0)            # (1, H)

    kernel = _make_posterior_kernel(L, K, dr, P, T)

    # index_maps receive (b, l, lens_ref, dil_ref) — prefetch refs positional.
    batch3 = lambda b, l, lens, dil: (b, 0, 0)       # per-batch blocks (x, noise, out)
    layer3 = lambda b, l, lens, dil: (l, 0, 0)       # per-layer streamed weights
    const2 = lambda b, l, lens, dil: (0, 0)          # broadcast (pre/proj/bias) blocks

    grid_spec = pltpu.PrefetchScalarGridSpec(
        num_scalar_prefetch=2,
        grid=(B, L),
        in_specs=[
            pl.BlockSpec((1, T, Cin), batch3),       # x
            pl.BlockSpec((1, T, Cout), batch3),      # noise
            pl.BlockSpec((Cin, H), const2),          # pre_w
            pl.BlockSpec((1, H), const2),            # pre_b
            pl.BlockSpec((1, K * H, H), layer3),     # in_wt (streamed per layer)
            pl.BlockSpec((1, 1, H), layer3),         # in_bt
            pl.BlockSpec((1, K * H, H), layer3),     # in_ws
            pl.BlockSpec((1, 1, H), layer3),         # in_bs
            pl.BlockSpec((1, H, H), layer3),         # res_w
            pl.BlockSpec((1, 1, H), layer3),         # res_b
            pl.BlockSpec((1, H, H), layer3),         # skip_w
            pl.BlockSpec((1, H), const2),            # skip_b_sum
            pl.BlockSpec((H, Cout), const2),         # proj_m_w
            pl.BlockSpec((1, Cout), const2),         # proj_m_b
            pl.BlockSpec((H, Cout), const2),         # proj_logs_w
            pl.BlockSpec((1, Cout), const2),         # proj_logs_b
        ],
        out_specs=pl.BlockSpec((1, T, 3 * Cout), batch3),   # [z | m | logs] merged
        scratch_shapes=[pltpu.VMEM((Tp, H), jnp.float32),   # padded residual stream
                        pltpu.VMEM((T, H), jnp.float32)],   # skip accumulator
    )

    # Advisory cost estimate so XLA overlaps the boundary transposes.
    flops = 2 * B * T * (Cin * H + L * (2 * K * H * H + 2 * H * H) + 2 * H * Cout)
    trans = B * T * (2 * L * H + Cout)
    wbytes = sum(int(v.size) * v.dtype.itemsize for v in
                 (params["pre_w"], in_wt, in_ws, params["res_w"], params["skip_w"],
                  params["proj_m_w"], params["proj_logs_w"]))
    bytes_accessed = int(x_btc.size * x_btc.dtype.itemsize
                         + n_btc.size * n_btc.dtype.itemsize
                         + B * T * 3 * Cout * jnp.dtype(x.dtype).itemsize
                         + wbytes)

    zml = pl.pallas_call(
        kernel,
        out_shape=jax.ShapeDtypeStruct((B, T, 3 * Cout), x.dtype),
        grid_spec=grid_spec,
        compiler_params=pltpu.CompilerParams(
            dimension_semantics=("parallel", "arbitrary"),   # batch || , layers stream
            vmem_limit_bytes=48 * 1024 * 1024),               # headroom on v5e/v6e, < v7x 64MiB
        cost_estimate=pl.CostEstimate(flops=int(flops), transcendentals=int(trans),
                                      bytes_accessed=bytes_accessed),
    )(lens, dil, x_btc, n_btc,
      params["pre_w"], params["pre_b"],
      in_wt, params["in_bt"], in_ws, params["in_bs"],
      params["res_w"], params["res_b"], params["skip_w"], skip_b_sum,
      params["proj_m_w"], params["proj_m_b"],
      params["proj_logs_w"], params["proj_logs_b"])

    zml = zml[:, :T0, :]
    z, m, logs = zml[..., :Cout], zml[..., Cout:2 * Cout], zml[..., 2 * Cout:]
    x_mask = (jnp.arange(T0)[None, :] < x_lengths[:, None]).astype(x.dtype)[:, None, :]
    to_bct = lambda a: jnp.transpose(a, (0, 2, 1))
    return to_bct(z), to_bct(m), to_bct(logs), x_mask


# ----------------------- params & pure-JAX reference -------------------------

def init_params(key, cfg, param_dtype=jnp.float32):
    """bf16 weight storage is recommended on ALL generations (v5e/v6e/v7x MXUs
    take bf16 with f32 accumulation; elementwise math stays f32 in-kernel).
    Biases remain f32."""
    Cin, Cout, H = cfg["in_channels"], cfg["out_channels"], cfg["hidden_channels"]
    K, L = cfg["kernel_size"], cfg["n_layers"]
    keys = iter(jax.random.split(key, 64))

    def nrm(shape, scale=0.2):
        return scale * jax.random.normal(next(keys), shape, jnp.float32)

    p = dict(
        pre_w=nrm((Cin, H)), pre_b=nrm((1, H), 0.01),
        in_wt=nrm((L, K, H, H)), in_bt=nrm((L, 1, H), 0.01),
        in_ws=nrm((L, K, H, H)), in_bs=nrm((L, 1, H), 0.01),
        # last layer's res half is never used (PyTorch last res_skip conv only
        # produces the skip channels); kept for a uniform stacked layout.
        res_w=nrm((L, H, H)), res_b=nrm((L, 1, H), 0.01),
        skip_w=nrm((L, H, H)), skip_b=nrm((L, 1, H), 0.01),
        proj_m_w=nrm((H, Cout)), proj_m_b=nrm((1, Cout), 0.01),
        proj_logs_w=nrm((H, Cout), 0.05), proj_logs_b=nrm((1, Cout), 0.01),
    )
    if param_dtype != jnp.float32:
        for k in list(p):
            if k.endswith("_w") or k in ("in_wt", "in_ws"):
                p[k] = p[k].astype(param_dtype)
    return p


def reference_forward(params, x, x_lengths, noise, cfg):
    """Pure-JAX f32 mirror of the PyTorch forward (for correctness check)."""
    B, Cin, T = x.shape
    K, L, dr = cfg["kernel_size"], cfg["n_layers"], cfg["dilation_rate"]
    dot = lambda a, b: jnp.matmul(a, b, precision=jax.lax.Precision.HIGHEST)
    p = {k: v.astype(jnp.float32) for k, v in params.items()}
    xb = jnp.transpose(x, (0, 2, 1)).astype(jnp.float32)
    nb = jnp.transpose(noise, (0, 2, 1)).astype(jnp.float32)
    mask = (jnp.arange(T)[None, :, None] < x_lengths[:, None, None]).astype(jnp.float32)

    h = (dot(xb, p["pre_w"]) + p["pre_b"]) * mask
    skip = jnp.zeros_like(h)
    for i in range(L):
        d = dr ** i
        pad = d * (K - 1) // 2
        hp = jnp.pad(h, ((0, 0), (pad, pad), (0, 0)))
        acc_t = jnp.zeros_like(h) + p["in_bt"][i]
        acc_s = jnp.zeros_like(h) + p["in_bs"][i]
        for k in range(K):
            xs = hp[:, k * d:k * d + T, :]
            acc_t = acc_t + dot(xs, p["in_wt"][i, k])
            acc_s = acc_s + dot(xs, p["in_ws"][i, k])
        acts = jnp.tanh(acc_t) * jax.nn.sigmoid(acc_s)
        if i < L - 1:
            h = (h + dot(acts, p["res_w"][i]) + p["res_b"][i]) * mask
        skip = skip + dot(acts, p["skip_w"][i]) + p["skip_b"][i]
    out = skip * mask
    m = (dot(out, p["proj_m_w"]) + p["proj_m_b"]) * mask
    logs = (dot(out, p["proj_logs_w"]) + p["proj_logs_b"]) * mask
    z = (m + nb * jnp.exp(logs)) * mask
    to_bct = lambda a: jnp.transpose(a, (0, 2, 1))
    x_mask = (jnp.arange(T)[None, :] < x_lengths[:, None]).astype(x.dtype)[:, None, :]
    return to_bct(z), to_bct(m), to_bct(logs), x_mask


# --------------------------------- main ---------------------------------------

if __name__ == "__main__":
    key = jax.random.PRNGKey(0)

    def run_and_check(cfg, B, T, key, param_dtype, check_ref):
        kx, kn, kp = jax.random.split(key, 3)
        x = jax.random.normal(kx, (B, cfg["in_channels"], T), jnp.float32)      # (B,C,T)
        noise = jax.random.normal(kn, (B, cfg["out_channels"], T), jnp.float32) # randn_like(m)
        x_lengths = jnp.array([T, max(T - 4, 1)][:B], jnp.int32)
        params = init_params(kp, cfg, param_dtype)
        fwd = jax.jit(lambda p, xx, ll, nn: posterior_encoder_forward(p, xx, ll, nn, cfg))
        z, m, logs, x_mask = jax.block_until_ready(fwd(params, x, x_lengths, noise))
        assert z.shape == (B, cfg["out_channels"], T) and x_mask.shape == (B, 1, T)
        assert bool(jnp.all(jnp.isfinite(z)))
        if check_ref:
            zr, mr, logsr, maskr = reference_forward(params, x, x_lengths, noise, cfg)
            for a, b in ((z, zr), (m, mr), (logs, logsr), (x_mask, maskr)):
                assert bool(jnp.all(jnp.isfinite(a)))
                assert jnp.allclose(a, b, atol=2e-2, rtol=2e-2), \
                    float(jnp.max(jnp.abs(a - b)))
        return z

    # ---- f32 weights, dilation_rate=1 (static tap path): check vs reference
    cfg1 = dict(in_channels=8, out_channels=4, hidden_channels=16,
                kernel_size=5, dilation_rate=1, n_layers=4)
    run_and_check(cfg1, B=2, T=16, key=jax.random.fold_in(key, 1),
                  param_dtype=jnp.float32, check_ref=True)

    # ---- f32 weights, dilation_rate=2 (dynamic tap path): check vs reference
    cfg2 = dict(in_channels=8, out_channels=4, hidden_channels=16,
                kernel_size=3, dilation_rate=2, n_layers=3)
    run_and_check(cfg2, B=2, T=16, key=jax.random.fold_in(key, 2),
                  param_dtype=jnp.float32, check_ref=True)

    # ---- bf16 weight storage (recommended on all generations), f32 accumulation
    z_bf16 = run_and_check(cfg1, B=2, T=16, key=jax.random.fold_in(key, 1),
                           param_dtype=jnp.bfloat16, check_ref=False)
    assert z_bf16.dtype == jnp.float32

    print("KERNEL_OK")
</pallas_src>

<mosaic_0001>
module attributes {stable_mosaic.version = 11 : i64} {
  func.func @kernel(%arg0: i32, %arg1: i32, %arg2: memref<2xi32, #tpu.memory_space<smem>>, %arg3: memref<4xi32, #tpu.memory_space<smem>>, %arg4: memref<1x16x8xf32, #tpu.memory_space<vmem>>, %arg5: memref<1x16x4xf32, #tpu.memory_space<vmem>>, %arg6: memref<8x16xf32, #tpu.memory_space<vmem>>, %arg7: memref<1x16xf32, #tpu.memory_space<vmem>>, %arg8: memref<1x80x16xf32, #tpu.memory_space<vmem>>, %arg9: memref<1x1x16xf32, #tpu.memory_space<vmem>>, %arg10: memref<1x80x16xf32, #tpu.memory_space<vmem>>, %arg11: memref<1x1x16xf32, #tpu.memory_space<vmem>>, %arg12: memref<1x16x16xf32, #tpu.memory_space<vmem>>, %arg13: memref<1x1x16xf32, #tpu.memory_space<vmem>>, %arg14: memref<1x16x16xf32, #tpu.memory_space<vmem>>, %arg15: memref<1x16xf32, #tpu.memory_space<vmem>>, %arg16: memref<16x4xf32, #tpu.memory_space<vmem>>, %arg17: memref<1x4xf32, #tpu.memory_space<vmem>>, %arg18: memref<16x4xf32, #tpu.memory_space<vmem>>, %arg19: memref<1x4xf32, #tpu.memory_space<vmem>>, %arg20: memref<1x16x12xf32, #tpu.memory_space<vmem>>, %arg21: memref<32x16xf32, #tpu.memory_space<vmem>>, %arg22: memref<16x16xf32, #tpu.memory_space<vmem>>) attributes {dimension_semantics = [#tpu.dimension_semantics<parallel>, #tpu.dimension_semantics<arbitrary>], iteration_bounds = array<i64: 2, 4>, scalar_prefetch = 2 : i64, scratch_operands = 2 : i64, tpu.core_type = #tpu.core_type<tc>, window_params = [{transform_indices = @transform_0, window_bounds = array<i64: 1, 16, 8>}, {transform_indices = @transform_1, window_bounds = array<i64: 1, 16, 4>}, {pipeline_mode = #tpu.pipeline_mode<synchronous>, transform_indices = @transform_2, window_bounds = array<i64: 8, 16>}, {pipeline_mode = #tpu.pipeline_mode<synchronous>, transform_indices = @transform_3, window_bounds = array<i64: 1, 16>}, {transform_indices = @transform_4, window_bounds = array<i64: 1, 80, 16>}, {transform_indices = @transform_5, window_bounds = array<i64: 1, 1, 16>}, {transform_indices = @transform_6, window_bounds = array<i64: 1, 80, 16>}, {transform_indices = @transform_7, window_bounds = array<i64: 1, 1, 16>}, {transform_indices = @transform_8, window_bounds = array<i64: 1, 16, 16>}, {transform_indices = @transform_9, window_bounds = array<i64: 1, 1, 16>}, {transform_indices = @transform_10, window_bounds = array<i64: 1, 16, 16>}, {pipeline_mode = #tpu.pipeline_mode<synchronous>, transform_indices = @transform_11, window_bounds = array<i64: 1, 16>}, {pipeline_mode = #tpu.pipeline_mode<synchronous>, transform_indices = @transform_12, window_bounds = array<i64: 16, 4>}, {pipeline_mode = #tpu.pipeline_mode<synchronous>, transform_indices = @transform_13, window_bounds = array<i64: 1, 4>}, {pipeline_mode = #tpu.pipeline_mode<synchronous>, transform_indices = @transform_14, window_bounds = array<i64: 16, 4>}, {pipeline_mode = #tpu.pipeline_mode<synchronous>, transform_indices = @transform_15, window_bounds = array<i64: 1, 4>}, {transform_indices = @transform_16, window_bounds = array<i64: 1, 16, 12>}]} {
    %0 = arith.index_cast %arg0 : i32 to index
    %1 = memref.load %arg2[%0] : memref<2xi32, #tpu.memory_space<smem>>
    %2 = tpu.iota {dimensions = array<i32: 0>} : vector<16x1xi32>
    %3 = vector.broadcast %1 : i32 to vector<16x1xi32>
    %4 = arith.cmpi slt, %2, %3 : vector<16x1xi32>
    %5 = arith.extui %4 : vector<16x1xi1> to vector<16x1xi32>
    %6 = arith.sitofp %5 : vector<16x1xi32> to vector<16x1xf32>
    %c0_i32 = arith.constant 0 : i32
    %7 = arith.cmpi eq, %arg1, %c0_i32 : i32
    %8 = arith.extui %7 : i1 to i32
    %c0_i32_0 = arith.constant 0 : i32
    %9 = arith.cmpi ne, %8, %c0_i32_0 : i32
    scf.if %9 {
      %c0_30 = arith.constant 0 : index
      %c0_31 = arith.constant 0 : index
      %c0_32 = arith.constant 0 : index
      %49 = vector.load %arg4[%c0_30, %c0_31, %c0_32] : memref<1x16x8xf32, #tpu.memory_space<vmem>>, vector<1x16x8xf32>
      %50 = vector.shape_cast %49 : vector<1x16x8xf32> to vector<16x8xf32>
      %c0_33 = arith.constant 0 : index
      %c0_34 = arith.constant 0 : index
      %51 = vector.load %arg6[%c0_33, %c0_34] : memref<8x16xf32, #tpu.memory_space<vmem>>, vector<8x16xf32>
      %cst_35 = arith.constant dense<0.000000e+00> : vector<16x16xf32>
      %52 = tpu.matmul %50, %51, %cst_35 {dimension_numbers = #tpu.dot_dimension_numbers<[1], [0], [0], [1], [0, 0, 1, 1], [], []>} : vector<16x8xf32>, vector<8x16xf32>, vector<16x16xf32> -> vector<16x16xf32>
      %c0_36 = arith.constant 0 : index
      %c0_37 = arith.constant 0 : index
      %53 = vector.load %arg7[%c0_36, %c0_37] : memref<1x16xf32, #tpu.memory_space<vmem>>, vector<1x16xf32>
      %54 = vector.broadcast %53 : vector<1x16xf32> to vector<16x16xf32>
      %55 = arith.addf %52, %54 : vector<16x16xf32>
      %56 = vector.broadcast %6 : vector<16x1xf32> to vector<16x16xf32>
      %57 = arith.mulf %55, %56 : vector<16x16xf32>
      %cst_38 = arith.constant 0.000000e+00 : f32
      %58 = vector.broadcast %cst_38 : f32 to vector<8x16xf32>
      %c0_39 = arith.constant 0 : index
      %c0_40 = arith.constant 0 : index
      %59 = vector.load %arg21[%c0_39, %c0_40] : memref<32x16xf32, #tpu.memory_space<vmem>>, vector<8x16xf32>
      tpu.vector_store %arg21[%c0_39, %c0_40], %58 {strides = array<i32>} : memref<32x16xf32, #tpu.memory_space<vmem>>, vector<8x16xf32>,
      %cst_41 = arith.constant 0.000000e+00 : f32
      %60 = vector.broadcast %cst_41 : f32 to vector<8x16xf32>
      %c24 = arith.constant 24 : index
      %c0_42 = arith.constant 0 : index
      %61 = vector.load %arg21[%c24, %c0_42] : memref<32x16xf32, #tpu.memory_space<vmem>>, vector<8x16xf32>
      tpu.vector_store %arg21[%c24, %c0_42], %60 {strides = array<i32>} : memref<32x16xf32, #tpu.memory_space<vmem>>, vector<8x16xf32>,
      %c8_43 = arith.constant 8 : index
      %c0_44 = arith.constant 0 : index
      %62 = vector.load %arg21[%c8_43, %c0_44] : memref<32x16xf32, #tpu.memory_space<vmem>>, vector<16x16xf32>
      tpu.vector_store %arg21[%c8_43, %c0_44], %57 {strides = array<i32>} : memref<32x16xf32, #tpu.memory_space<vmem>>, vector<16x16xf32>,
      %cst_45 = arith.constant 0.000000e+00 : f32
      %63 = vector.broadcast %cst_45 : f32 to vector<16x16xf32>
      %c0_46 = arith.constant 0 : index
      %c0_47 = arith.constant 0 : index
      %64 = vector.load %arg22[%c0_46, %c0_47] : memref<16x16xf32, #tpu.memory_space<vmem>>, vector<16x16xf32>
      tpu.vector_store %arg22[%c0_46, %c0_47], %63 {strides = array<i32>} : memref<16x16xf32, #tpu.memory_space<vmem>>, vector<16x16xf32>,
    } else {
    }
    %c6 = arith.constant 6 : index
    %c0 = arith.constant 0 : index
    %10 = vector.load %arg21[%c6, %c0] : memref<32x16xf32, #tpu.memory_space<vmem>>, vector<16x16xf32>
    %c7 = arith.constant 7 : index
    %c0_1 = arith.constant 0 : index
    %11 = vector.load %arg21[%c7, %c0_1] : memref<32x16xf32, #tpu.memory_space<vmem>>, vector<16x16xf32>
    %c8 = arith.constant 8 : index
    %c0_2 = arith.constant 0 : index
    %12 = vector.load %arg21[%c8, %c0_2] : memref<32x16xf32, #tpu.memory_space<vmem>>, vector<16x16xf32>
    %c9 = arith.constant 9 : index
    %c0_3 = arith.constant 0 : index
    %13 = vector.load %arg21[%c9, %c0_3] : memref<32x16xf32, #tpu.memory_space<vmem>>, vector<16x16xf32>
    %c10 = arith.constant 10 : index
    %c0_4 = arith.constant 0 : index
    %14 = vector.load %arg21[%c10, %c0_4] : memref<32x16xf32, #tpu.memory_space<vmem>>, vector<16x16xf32>
    %15 = tpu.concatenate %10, %11, %12, %13, %14 in 1 : vector<16x16xf32>, vector<16x16xf32>, vector<16x16xf32>, vector<16x16xf32>, vector<16x16xf32> -> vector<16x80xf32>
    %c0_5 = arith.constant 0 : index
    %c0_6 = arith.constant 0 : index
    %c0_7 = arith.constant 0 : index
    %16 = vector.load %arg8[%c0_5, %c0_6, %c0_7] : memref<1x80x16xf32, #tpu.memory_space<vmem>>, vector<1x80x16xf32>
    %17 = vector.shape_cast %16 : vector<1x80x16xf32> to vector<80x16xf32>
    %cst = arith.constant dense<0.000000e+00> : vector<16x16xf32>
    %18 = tpu.matmul %15, %17, %cst {dimension_numbers = #tpu.dot_dimension_numbers<[1], [0], [0], [1], [0, 0, 1, 1], [], []>} : vector<16x80xf32>, vector<80x16xf32>, vector<16x16xf32> -> vector<16x16xf32>
    %c0_8 = arith.constant 0 : index
    %c0_9 = arith.constant 0 : index
    %c0_10 = arith.constant 0 : index
    %19 = vector.load %arg9[%c0_8, %c0_9, %c0_10] : memref<1x1x16xf32, #tpu.memory_space<vmem>>, vector<1x1x16xf32>
    %20 = vector.shape_cast %19 : vector<1x1x16xf32> to vector<1x16xf32>
    %21 = vector.broadcast %20 : vector<1x16xf32> to vector<16x16xf32>
    %22 = arith.addf %18, %21 : vector<16x16xf32>
    %c0_11 = arith.constant 0 : index
    %c0_12 = arith.constant 0 : index
    %c0_13 = arith.constant 0 : index
    %23 = vector.load %arg10[%c0_11, %c0_12, %c0_13] : memref<1x80x16xf32, #tpu.memory_space<vmem>>, vector<1x80x16xf32>
    %24 = vector.shape_cast %23 : vector<1x80x16xf32> to vector<80x16xf32>
    %cst_14 = arith.constant dense<0.000000e+00> : vector<16x16xf32>
    %25 = tpu.matmul %15, %24, %cst_14 {dimension_numbers = #tpu.dot_dimension_numbers<[1], [0], [0], [1], [0, 0, 1, 1], [], []>} : vector<16x80xf32>, vector<80x16xf32>, vector<16x16xf32> -> vector<16x16xf32>
    %c0_15 = arith.constant 0 : index
    %c0_16 = arith.constant 0 : index
    %c0_17 = arith.constant 0 : index
    %26 = vector.load %arg11[%c0_15, %c0_16, %c0_17] : memref<1x1x16xf32, #tpu.memory_space<vmem>>, vector<1x1x16xf32>
    %27 = vector.shape_cast %26 : vector<1x1x16xf32> to vector<1x16xf32>
    %28 = vector.broadcast %27 : vector<1x16xf32> to vector<16x16xf32>
    %29 = arith.addf %25, %28 : vector<16x16xf32>
    %30 = math.tanh %22 : vector<16x16xf32>
    %31 = arith.negf %29 : vector<16x16xf32>
    %32 = math.exp %31 : vector<16x16xf32>
    %cst_18 = arith.constant 1.000000e+00 : f32
    %33 = vector.broadcast %cst_18 : f32 to vector<16x16xf32>
    %34 = arith.addf %33, %32 : vector<16x16xf32>
    %35 = arith.divf %33, %34 : vector<16x16xf32>
    %36 = arith.mulf %30, %35 : vector<16x16xf32>
    %c3_i32 = arith.constant 3 : i32
    %37 = arith.cmpi slt, %arg1, %c3_i32 : i32
    %38 = arith.extui %37 : i1 to i32
    %c0_i32_19 = arith.constant 0 : i32
    %39 = arith.cmpi ne, %38, %c0_i32_19 : i32
    scf.if %39 {
      %c0_30 = arith.constant 0 : index
      %c0_31 = arith.constant 0 : index
      %c0_32 = arith.constant 0 : index
      %49 = vector.load %arg12[%c0_30, %c0_31, %c0_32] : memref<1x16x16xf32, #tpu.memory_space<vmem>>, vector<1x16x16xf32>
      %50 = vector.shape_cast %49 : vector<1x16x16xf32> to vector<16x16xf32>
      %cst_33 = arith.constant dense<0.000000e+00> : vector<16x16xf32>
      %51 = tpu.matmul %36, %50, %cst_33 {dimension_numbers = #tpu.dot_dimension_numbers<[1], [0], [0], [1], [0, 0, 1, 1], [], []>} : vector<16x16xf32>, vector<16x16xf32>, vector<16x16xf32> -> vector<16x16xf32>
      %c0_34 = arith.constant 0 : index
      %c0_35 = arith.constant 0 : index
      %c0_36 = arith.constant 0 : index
      %52 = vector.load %arg13[%c0_34, %c0_35, %c0_36] : memref<1x1x16xf32, #tpu.memory_space<vmem>>, vector<1x1x16xf32>
      %53 = vector.shape_cast %52 : vector<1x1x16xf32> to vector<1x16xf32>
      %54 = vector.broadcast %53 : vector<1x16xf32> to vector<16x16xf32>
      %55 = arith.addf %51, %54 : vector<16x16xf32>
      %c8_37 = arith.constant 8 : index
      %c0_38 = arith.constant 0 : index
      %56 = vector.load %arg21[%c8_37, %c0_38] : memref<32x16xf32, #tpu.memory_space<vmem>>, vector<16x16xf32>
      %57 = arith.addf %56, %55 : vector<16x16xf32>
      %58 = vector.broadcast %6 : vector<16x1xf32> to vector<16x16xf32>
      %59 = arith.mulf %57, %58 : vector<16x16xf32>
      %c8_39 = arith.constant 8 : index
      %c0_40 = arith.constant 0 : index
      %60 = vector.load %arg21[%c8_39, %c0_40] : memref<32x16xf32, #tpu.memory_space<vmem>>, vector<16x16xf32>
      tpu.vector_store %arg21[%c8_39, %c0_40], %59 {strides = array<i32>} : memref<32x16xf32, #tpu.memory_space<vmem>>, vector<16x16xf32>,
    } else {
    }
    %c0_20 = arith.constant 0 : index
    %c0_21 = arith.constant 0 : index
    %40 = vector.load %arg22[%c0_20, %c0_21] : memref<16x16xf32, #tpu.memory_space<vmem>>, vector<16x16xf32>
    %c0_22 = arith.constant 0 : index
    %c0_23 = arith.constant 0 : index
    %c0_24 = arith.constant 0 : index
    %41 = vector.load %arg14[%c0_22, %c0_23, %c0_24] : memref<1x16x16xf32, #tpu.memory_space<vmem>>, vector<1x16x16xf32>
    %42 = vector.shape_cast %41 : vector<1x16x16xf32> to vector<16x16xf32>
    %cst_25 = arith.constant dense<0.000000e+00> : vector<16x16xf32>
    %43 = tpu.matmul %36, %42, %cst_25 {dimension_numbers = #tpu.dot_dimension_numbers<[1], [0], [0], [1], [0, 0, 1, 1], [], []>} : vector<16x16xf32>, vector<16x16xf32>, vector<16x16xf32> -> vector<16x16xf32>
    %44 = arith.addf %40, %43 : vector<16x16xf32>
    %c0_26 = arith.constant 0 : index
    %c0_27 = arith.constant 0 : index
    %45 = vector.load %arg22[%c0_26, %c0_27] : memref<16x16xf32, #tpu.memory_space<vmem>>, vector<16x16xf32>
    tpu.vector_store %arg22[%c0_26, %c0_27], %44 {strides = array<i32>} : memref<16x16xf32, #tpu.memory_space<vmem>>, vector<16x16xf32>,
    %c3_i32_28 = arith.constant 3 : i32
    %46 = arith.cmpi eq, %arg1, %c3_i32_28 : i32
    %47 = arith.extui %46 : i1 to i32
    %c0_i32_29 = arith.constant 0 : i32
    %48 = arith.cmpi ne, %47, %c0_i32_29 : i32
    scf.if %48 {
      %c0_30 = arith.constant 0 : index
      %c0_31 = arith.constant 0 : index
      %49 = vector.load %arg22[%c0_30, %c0_31] : memref<16x16xf32, #tpu.memory_space<vmem>>, vector<16x16xf32>
      %c0_32 = arith.constant 0 : index
      %c0_33 = arith.constant 0 : index
      %50 = vector.load %arg15[%c0_32, %c0_33] : memref<1x16xf32, #tpu.memory_space<vmem>>, vector<1x16xf32>
      %51 = vector.broadcast %50 : vector<1x16xf32> to vector<16x16xf32>
      %52 = arith.addf %49, %51 : vector<16x16xf32>
      %53 = vector.broadcast %6 : vector<16x1xf32> to vector<16x16xf32>
      %54 = arith.mulf %52, %53 : vector<16x16xf32>
      %c0_34 = arith.constant 0 : index
      %c0_35 = arith.constant 0 : index
      %55 = vector.load %arg16[%c0_34, %c0_35] : memref<16x4xf32, #tpu.memory_space<vmem>>, vector<16x4xf32>
      %cst_36 = arith.constant dense<0.000000e+00> : vector<16x4xf32>
      %56 = tpu.matmul %54, %55, %cst_36 {dimension_numbers = #tpu.dot_dimension_numbers<[1], [0], [0], [1], [0, 0, 1, 1], [], []>} : vector<16x16xf32>, vector<16x4xf32>, vector<16x4xf32> -> vector<16x4xf32>
      %c0_37 = arith.constant 0 : index
      %c0_38 = arith.constant 0 : index
      %57 = vector.load %arg17[%c0_37, %c0_38] : memref<1x4xf32, #tpu.memory_space<vmem>>, vector<1x4xf32>
      %58 = vector.broadcast %57 : vector<1x4xf32> to vector<16x4xf32>
      %59 = arith.addf %56, %58 : vector<16x4xf32>
      %60 = vector.broadcast %6 : vector<16x1xf32> to vector<16x4xf32>
      %61 = arith.mulf %59, %60 : vector<16x4xf32>
      %c0_39 = arith.constant 0 : index
      %c0_40 = arith.constant 0 : index
      %62 = vector.load %arg18[%c0_39, %c0_40] : memref<16x4xf32, #tpu.memory_space<vmem>>, vector<16x4xf32>
      %cst_41 = arith.constant dense<0.000000e+00> : vector<16x4xf32>
      %63 = tpu.matmul %54, %62, %cst_41 {dimension_numbers = #tpu.dot_dimension_numbers<[1], [0], [0], [1], [0, 0, 1, 1], [], []>} : vector<16x16xf32>, vector<16x4xf32>, vector<16x4xf32> -> vector<16x4xf32>
      %c0_42 = arith.constant 0 : index
      %c0_43 = arith.constant 0 : index
      %64 = vector.load %arg19[%c0_42, %c0_43] : memref<1x4xf32, #tpu.memory_space<vmem>>, vector<1x4xf32>
      %65 = vector.broadcast %64 : vector<1x4xf32> to vector<16x4xf32>
      %66 = arith.addf %63, %65 : vector<16x4xf32>
      %67 = vector.broadcast %6 : vector<16x1xf32> to vector<16x4xf32>
      %68 = arith.mulf %66, %67 : vector<16x4xf32>
      %c0_44 = arith.constant 0 : index
      %c0_45 = arith.constant 0 : index
      %c0_46 = arith.constant 0 : index
      %69 = vector.load %arg5[%c0_44, %c0_45, %c0_46] : memref<1x16x4xf32, #tpu.memory_space<vmem>>, vector<1x16x4xf32>
      %70 = vector.shape_cast %69 : vector<1x16x4xf32> to vector<16x4xf32>
      %71 = math.exp %68 : vector<16x4xf32>
      %72 = arith.mulf %70, %71 : vector<16x4xf32>
      %73 = arith.addf %61, %72 : vector<16x4xf32>
      %74 = vector.broadcast %6 : vector<16x1xf32> to vector<16x4xf32>
      %75 = arith.mulf %73, %74 : vector<16x4xf32>
      %76 = tpu.concatenate %75, %61, %68 in 1 : vector<16x4xf32>, vector<16x4xf32>, vector<16x4xf32> -> vector<16x12xf32>
      %c0_47 = arith.constant 0 : index
      %c0_48 = arith.constant 0 : index
      %c0_49 = arith.constant 0 : index
      %77 = vector.load %arg20[%c0_47, %c0_48, %c0_49] : memref<1x16x12xf32, #tpu.memory_space<vmem>>, vector<1x16x12xf32>
      %78 = vector.shape_cast %77 : vector<1x16x12xf32> to vector<16x12xf32>
      %79 = vector.shape_cast %76 : vector<16x12xf32> to vector<1x16x12xf32>
      tpu.vector_store %arg20[%c0_47, %c0_48, %c0_49], %79 {strides = array<i32>} : memref<1x16x12xf32, #tpu.memory_space<vmem>>, vector<1x16x12xf32>,
    } else {
    }
    return
  }
  func.func @transform_0(%arg0: i32, %arg1: i32, %arg2: memref<2xi32, #tpu.memory_space<smem>>, %arg3: memref<4xi32, #tpu.memory_space<smem>>) -> (i32, i32, i32) {
    %c0_i32 = arith.constant 0 : i32
    %c0_i32_0 = arith.constant 0 : i32
    %c0_i32_1 = arith.constant 0 : i32
    return %arg0, %c0_i32, %c0_i32_0 : i32, i32, i32
  }
  func.func @transform_1(%arg0: i32, %arg1: i32, %arg2: memref<2xi32, #tpu.memory_space<smem>>, %arg3: memref<4xi32, #tpu.memory_space<smem>>) -> (i32, i32, i32) {
    %c0_i32 = arith.constant 0 : i32
    %c0_i32_0 = arith.constant 0 : i32
    %c0_i32_1 = arith.constant 0 : i32
    return %arg0, %c0_i32, %c0_i32_0 : i32, i32, i32
  }
  func.func @transform_2(%arg0: i32, %arg1: i32, %arg2: memref<2xi32, #tpu.memory_space<smem>>, %arg3: memref<4xi32, #tpu.memory_space<smem>>) -> (i32, i32) {
    %c0_i32 = arith.constant 0 : i32
    %c0_i32_0 = arith.constant 0 : i32
    %c0_i32_1 = arith.constant 0 : i32
    return %c0_i32, %c0_i32_0 : i32, i32
  }
  func.func @transform_3(%arg0: i32, %arg1: i32, %arg2: memref<2xi32, #tpu.memory_space<smem>>, %arg3: memref<4xi32, #tpu.memory_space<smem>>) -> (i32, i32) {
    %c0_i32 = arith.constant 0 : i32
    %c0_i32_0 = arith.constant 0 : i32
    %c0_i32_1 = arith.constant 0 : i32
    return %c0_i32, %c0_i32_0 : i32, i32
  }
  func.func @transform_4(%arg0: i32, %arg1: i32, %arg2: memref<2xi32, #tpu.memory_space<smem>>, %arg3: memref<4xi32, #tpu.memory_space<smem>>) -> (i32, i32, i32) {
    %c0_i32 = arith.constant 0 : i32
    %c0_i32_0 = arith.constant 0 : i32
    %c0_i32_1 = arith.constant 0 : i32
    return %arg1, %c0_i32, %c0_i32_0 : i32, i32, i32
  }
  func.func @transform_5(%arg0: i32, %arg1: i32, %arg2: memref<2xi32, #tpu.memory_space<smem>>, %arg3: memref<4xi32, #tpu.memory_space<smem>>) -> (i32, i32, i32) {
    %c0_i32 = arith.constant 0 : i32
    %c0_i32_0 = arith.constant 0 : i32
    %c0_i32_1 = arith.constant 0 : i32
    return %arg1, %c0_i32, %c0_i32_0 : i32, i32, i32
  }
  func.func @transform_6(%arg0: i32, %arg1: i32, %arg2: memref<2xi32, #tpu.memory_space<smem>>, %arg3: memref<4xi32, #tpu.memory_space<smem>>) -> (i32, i32, i32) {
    %c0_i32 = arith.constant 0 : i32
    %c0_i32_0 = arith.constant 0 : i32
    %c0_i32_1 = arith.constant 0 : i32
    return %arg1, %c0_i32, %c0_i32_0 : i32, i32, i32
  }
  func.func @transform_7(%arg0: i32, %arg1: i32, %arg2: memref<2xi32, #tpu.memory_space<smem>>, %arg3: memref<4xi32, #tpu.memory_space<smem>>) -> (i32, i32, i32) {
    %c0_i32 = arith.constant 0 : i32
    %c0_i32_0 = arith.constant 0 : i32
    %c0_i32_1 = arith.constant 0 : i32
    return %arg1, %c0_i32, %c0_i32_0 : i32, i32, i32
  }
  func.func @transform_8(%arg0: i32, %arg1: i32, %arg2: memref<2xi32, #tpu.memory_space<smem>>, %arg3: memref<4xi32, #tpu.memory_space<smem>>) -> (i32, i32, i32) {
    %c0_i32 = arith.constant 0 : i32
    %c0_i32_0 = arith.constant 0 : i32
    %c0_i32_1 = arith.constant 0 : i32
    return %arg1, %c0_i32, %c0_i32_0 : i32, i32, i32
  }
  func.func @transform_9(%arg0: i32, %arg1: i32, %arg2: memref<2xi32, #tpu.memory_space<smem>>, %arg3: memref<4xi32, #tpu.memory_space<smem>>) -> (i32, i32, i32) {
    %c0_i32 = arith.constant 0 : i32
    %c0_i32_0 = arith.constant 0 : i32
    %c0_i32_1 = arith.constant 0 : i32
    return %arg1, %c0_i32, %c0_i32_0 : i32, i32, i32
  }
  func.func @transform_10(%arg0: i32, %arg1: i32, %arg2: memref<2xi32, #tpu.memory_space<smem>>, %arg3: memref<4xi32, #tpu.memory_space<smem>>) -> (i32, i32, i32) {
    %c0_i32 = arith.constant 0 : i32
    %c0_i32_0 = arith.constant 0 : i32
    %c0_i32_1 = arith.constant 0 : i32
    return %arg1, %c0_i32, %c0_i32_0 : i32, i32, i32
  }
  func.func @transform_11(%arg0: i32, %arg1: i32, %arg2: memref<2xi32, #tpu.memory_space<smem>>, %arg3: memref<4xi32, #tpu.memory_space<smem>>) -> (i32, i32) {
    %c0_i32 = arith.constant 0 : i32
    %c0_i32_0 = arith.constant 0 : i32
    %c0_i32_1 = arith.constant 0 : i32
    return %c0_i32, %c0_i32_0 : i32, i32
  }
  func.func @transform_12(%arg0: i32, %arg1: i32, %arg2: memref<2xi32, #tpu.memory_space<smem>>, %arg3: memref<4xi32, #tpu.memory_space<smem>>) -> (i32, i32) {
    %c0_i32 = arith.constant 0 : i32
    %c0_i32_0 = arith.constant 0 : i32
    %c0_i32_1 = arith.constant 0 : i32
    return %c0_i32, %c0_i32_0 : i32, i32
  }
  func.func @transform_13(%arg0: i32, %arg1: i32, %arg2: memref<2xi32, #tpu.memory_space<smem>>, %arg3: memref<4xi32, #tpu.memory_space<smem>>) -> (i32, i32) {
    %c0_i32 = arith.constant 0 : i32
    %c0_i32_0 = arith.constant 0 : i32
    %c0_i32_1 = arith.constant 0 : i32
    return %c0_i32, %c0_i32_0 : i32, i32
  }
  func.func @transform_14(%arg0: i32, %arg1: i32, %arg2: memref<2xi32, #tpu.memory_space<smem>>, %arg3: memref<4xi32, #tpu.memory_space<smem>>) -> (i32, i32) {
    %c0_i32 = arith.constant 0 : i32
    %c0_i32_0 = arith.constant 0 : i32
    %c0_i32_1 = arith.constant 0 : i32
    return %c0_i32, %c0_i32_0 : i32, i32
  }
  func.func @transform_15(%arg0: i32, %arg1: i32, %arg2: memref<2xi32, #tpu.memory_space<smem>>, %arg3: memref<4xi32, #tpu.memory_space<smem>>) -> (i32, i32) {
    %c0_i32 = arith.constant 0 : i32
    %c0_i32_0 = arith.constant 0 : i32
    %c0_i32_1 = arith.constant 0 : i32
    return %c0_i32, %c0_i32_0 : i32, i32
  }
  func.func @transform_16(%arg0: i32, %arg1: i32, %arg2: memref<2xi32, #tpu.memory_space<smem>>, %arg3: memref<4xi32, #tpu.memory_space<smem>>) -> (i32, i32, i32) {
    %c0_i32 = arith.constant 0 : i32
    %c0_i32_0 = arith.constant 0 : i32
    %c0_i32_1 = arith.constant 0 : i32
    return %arg0, %c0_i32, %c0_i32_0 : i32, i32, i32
  }
}

</mosaic_0001>

<llo_original>
// kernel: _lambda_.1
$region0: #{_lambda_.1}
  #allocation0 [shape = 'u32[]', space=smem, size = 0x4, offset = 0x4, fixed_abs, tag = 'smem constant byte address 0x4 - core index']
  #allocation1 [shape = 'u32[144,128]{1,0:T(1,128)}', space=vmem, size = 0x12000, scoped, tag = 'internal scratch']
  #allocation2 [shape = 'f32[32,16]{1,0:T(8,128)}', space=vmem, size = 0x4000, scoped, tag = 'scratch operand']
  #allocation3 [shape = 'f32[16,16]{1,0:T(8,128)}', space=vmem, size = 0x2000, scoped, tag = 'scratch operand']
  #allocation4 [shape = 's32[1]{0}', space=sflag, size = 0x4, scoped, tag = 'scoped memory for _lambda_.1']
  #allocation5 [shape = 'u8[512]{0}', space=smem, size = 0x200, scoped, tag = 'prefetched SMEM operand 0']
  #allocation6 [shape = 'u8[512]{0}', space=smem, size = 0x200, scoped, tag = 'prefetched SMEM operand 1']
  %s0 = inlined_call_operand.vmem [shape: s32[2], index: 0, kind: input, shape index: {}]
  %s1 = inlined_call_operand.vmem [shape: s32[4], index: 1, kind: input, shape index: {}]
  %s2 = inlined_call_operand.vmem [shape: f32[2,16,8], index: 2, kind: input, shape index: {}]
  %s3 = inlined_call_operand.vmem [shape: f32[2,16,4], index: 3, kind: input, shape index: {}]
  %s4 = inlined_call_operand.vmem [shape: f32[8,16], index: 4, kind: input, shape index: {}]
  %s5 = inlined_call_operand.vmem [shape: f32[1,16], index: 5, kind: input, shape index: {}]
  %s6 = inlined_call_operand.hbm [shape: f32[4,80,16], index: 6, kind: input, shape index: {}]
  %s7 = inlined_call_operand.vmem [shape: f32[4,1,16], index: 7, kind: input, shape index: {}]
  %s8 = inlined_call_operand.hbm [shape: f32[4,80,16], index: 8, kind: input, shape index: {}]
  %s9 = inlined_call_operand.vmem [shape: f32[4,1,16], index: 9, kind: input, shape index: {}]
  %s10 = inlined_call_operand.vmem [shape: f32[4,16,16], index: 10, kind: input, shape index: {}]
  %s11 = inlined_call_operand.vmem [shape: f32[4,1,16], index: 11, kind: input, shape index: {}]
  %s12 = inlined_call_operand.vmem [shape: f32[4,16,16], index: 12, kind: input, shape index: {}]
  %s13 = inlined_call_operand.vmem [shape: f32[1,16], index: 13, kind: input, shape index: {}]
  %s14 = inlined_call_operand.vmem [shape: f32[16,4], index: 14, kind: input, shape index: {}]
  %s15 = inlined_call_operand.hbm [shape: f32[1,4], index: 15, kind: input, shape index: {}]
  %s16 = inlined_call_operand.vmem [shape: f32[16,4], index: 16, kind: input, shape index: {}]
  %s17 = inlined_call_operand.vmem [shape: f32[1,4], index: 17, kind: input, shape index: {}]
  %s18 = inlined_call_operand.vmem [shape: f32[2,16,12], index: 18, kind: output, shape index: {}]
  %s19 = sld [smem:[#allocation0]]
  $region121: #{_lambda_.1} parent=0
    _
  %s21 = ssub.s32 1, %s19
  %s22 = scalar_select 0, %s21, %s19
  %s23 = sshll.u32 %s0, 4
  %s24 = int_to_ptr.vmem [resolvable:$true] %s23
  %26 = dma.vmem_to_smem %s24, 16, [#allocation5], [#allocation4]
  %s27 = sshll.u32 %s1, 4
  %s28 = int_to_ptr.vmem [resolvable:$true] %s27
  %30 = dma.vmem_to_smem %s28, 16, [#allocation6], [#allocation4]
  %31 = dma.done [#allocation4], 32
  %32 = sfence
  $region1: #{_lambda_.1} parent=0
    #allocation7 [shape = 'u8[81920]{0}', space=vmem, size = 0x14000, scoped, tag = 'input window, operand 6']
    #allocation8 [shape = 's32[2]{0}', space=sflag, size = 0x8, scoped, tag = 'scoped memory for _lambda_.1']
    #allocation9 [shape = 'u8[81920]{0}', space=vmem, size = 0x14000, scoped, tag = 'input window, operand 8']
    #allocation10 [shape = 's32[2]{0}', space=sflag, size = 0x8, scoped, tag = 'scoped memory for _lambda_.1']
    #allocation11 [shape = 'u8[512]{0}', space=vmem, size = 0x400, scoped, tag = 'input window, operand 15, single buffered']
    %33 = vsyncpa [#allocation8], 0
    %s34 = scalar_lea.sflag [#allocation8], 1
    %35 = vsyncpa %s34, 0
    %36 = vsyncpa [#allocation10], 0
    %s37 = scalar_lea.sflag [#allocation10], 1
    %38 = vsyncpa %s37, 0
    loop: start=0, step=1, limit=10
    $region2: #{_lambda_.1} parent=1 // loop_pre_header
      _
    $region3: #{_lambda_.1} parent=1 // loop_header
      %s40 = sphi 0, %s44
      %p41 = scmp.ge.s32.totalorder %s40, 10
      %s47 = sphi 0, %s59
      %s48 = sphi 0, %s55
      %s49 = sphi 0, %s47
      %s50 = sphi 0, %s48
      %s51 = sphi 0, %s49
      %s52 = sphi 0, %s50
      %s62 = sphi 0, %s64
      %s65 = sphi 0, %s62
      %s66 = sphi 0, %s65
      %s82 = sphi 0, %s66
      %s88 = sphi 0, %s90
      %s91 = sphi 0, %s88
      %s92 = sphi 0, %s91
      %s108 = sphi 0, %s92
      %s112 = sphi 0, %s112
      %s114 = sphi 0, %s112
      %s115 = sphi 0, %s114
      %s129 = sphi 0, %s115
      %s133 = sphi 0, %s133
      %s135 = sphi 0, %s133
      %s136 = sphi 0, %s135
      %s150 = sphi 0, %s136
      %s156 = sphi 0, %s158
      %s159 = sphi 0, %s156
      %s160 = sphi 0, %s159
      %s176 = sphi 0, %s160
      %s182 = sphi 0, %s184
      %s185 = sphi 0, %s182
      %s186 = sphi 0, %s185
      %s202 = sphi 0, %s186
      %s208 = sphi 0, %s210
      %s211 = sphi 0, %s208
      %s212 = sphi 0, %s211
      %s228 = sphi 0, %s212
      %s234 = sphi 0, %s236
      %s237 = sphi 0, %s234
      %s238 = sphi 0, %s237
      %s254 = sphi 0, %s238
      %s260 = sphi 0, %s262
      %s263 = sphi 0, %s260
      %s264 = sphi 0, %s263
      %s280 = sphi 0, %s264
      %s286 = sphi 0, %s288
      %s289 = sphi 0, %s286
      %s290 = sphi 0, %s289
      %s306 = sphi 0, %s290
      %s312 = sphi 0, %s314
      %s315 = sphi 0, %s312
      %s316 = sphi 0, %s315
      %s332 = sphi 0, %s316
      %s336 = sphi 0, %s336
      %s338 = sphi 0, %s336
      %s339 = sphi 0, %s338
      %s353 = sphi 0, %s339
      %s357 = sphi 0, %s357
      %s359 = sphi 0, %s357
      %s360 = sphi 0, %s359
      %s374 = sphi 0, %s360
      %s378 = sphi 0, %s378
      %s380 = sphi 0, %s378
      %s381 = sphi 0, %s380
      %s395 = sphi 0, %s381
      %s399 = sphi 0, %s399
      %s401 = sphi 0, %s399
      %s402 = sphi 0, %s401
      %s416 = sphi 0, %s402
      %s420 = sphi 0, %s420
      %s422 = sphi 0, %s420
      %s423 = sphi 0, %s422
      %s437 = sphi 0, %s423
      %s443 = sphi 0, %s445
      %s446 = sphi 0, %s443
      %s447 = sphi 0, %s446
      %s463 = sphi 0, %s447
    $region4: #{_lambda_.1} parent=1 // loop_header_branch
      %43 = sbr.rel (%p41) target = $region8
    $region5: #{_lambda_.1} parent=1 // loop_body
      %s45 = ssub.s32 %s40, 1
      %s46 = ssub.s32 %s40, 2
      %s53 = sadd.s32 1, %s48
      %p54 = scmp.ge.s32.totalorder %s53, 4
      %s55 = scalar_select %p54, 0, %s53
      %s56 = sadd.s32 1, %s47
      %s57 = scalar_select %p54, %s56, %s47
      %p58 = scmp.ge.s32.totalorder %s57, 2
      %s59 = scalar_select %p58, 0, %s57
      %s60 = ssub.s32 %s47, %s59
      %p61 = scmp.eq.s32.totalorder %s60, 0
      %s63 = sadd.s32 %s62, 1
      %s64 = scalar_select %p61, %s62, %s63
      %p67 = pneg %p61
      %p68 = scmp.eq.s32.totalorder %s40, 7
      %p69 = por %p67, %p68
      %p70 = scmp.ne.s32.totalorder %s62, %s65
      %p71 = scmp.eq.s32.totalorder %s40, 0
      %p72 = por %p70, %p71
      %p73 = scmp.ne.s32.totalorder %s62, %s65
      %p74 = scmp.eq.s32.totalorder %s45, 7
      %p75 = por %p73, %p74
      %p76 = scmp.ne.s32.totalorder %s65, %s66
      %p77 = scmp.eq.s32.totalorder %s45, 0
      %p78 = por %p76, %p77
      %p79 = scmp.ne.s32.totalorder %s65, %s66
      %p80 = scmp.eq.s32.totalorder %s46, 7
      %p81 = por %p79, %p80
      %p83 = scmp.ne.s32.totalorder %s66, %s82
      %p84 = scmp.eq.s32.totalorder %s46, 0
      %p85 = por %p83, %p84
      %s86 = ssub.s32 %s47, %s59
      %p87 = scmp.eq.s32.totalorder %s86, 0
      %s89 = sadd.s32 %s88, 1
      %s90 = scalar_select %p87, %s88, %s89
      %p93 = pneg %p87
      %p94 = scmp.eq.s32.totalorder %s40, 7
      %p95 = por %p93, %p94
      %p96 = scmp.ne.s32.totalorder %s88, %s91
      %p97 = scmp.eq.s32.totalorder %s40, 0
      %p98 = por %p96, %p97
      %p99 = scmp.ne.s32.totalorder %s88, %s91
      %p100 = scmp.eq.s32.totalorder %s45, 7
      %p101 = por %p99, %p100
      %p102 = scmp.ne.s32.totalorder %s91, %s92
      %p103 = scmp.eq.s32.totalorder %s45, 0
      %p104 = por %p102, %p103
      %p105 = scmp.ne.s32.totalorder %s91, %s92
      %p106 = scmp.eq.s32.totalorder %s46, 7
      %p107 = por %p105, %p106
      %p109 = scmp.ne.s32.totalorder %s92, %s108
      %p110 = scmp.eq.s32.totalorder %s46, 0
      %p111 = por %p109, %p110
      %s113 = sadd.s32 %s112, 1
      %p116 = scmp.eq.s32.totalorder %s40, 7
      %p117 = scmp.ne.s32.totalorder %s112, %s114
      %p118 = scmp.eq.s32.totalorder %s40, 0
      %p119 = por %p117, %p118
      %p120 = scmp.ne.s32.totalorder %s112, %s114
      %p121 = scmp.eq.s32.totalorder %s45, 7
      %p122 = por %p120, %p121
      %p123 = scmp.ne.s32.totalorder %s114, %s115
      %p124 = scmp.eq.s32.totalorder %s45, 0
      %p125 = por %p123, %p124
      %p126 = scmp.ne.s32.totalorder %s114, %s115
      %p127 = scmp.eq.s32.totalorder %s46, 7
      %p128 = por %p126, %p127
      %p130 = scmp.ne.s32.totalorder %s115, %s129
      %p131 = scmp.eq.s32.totalorder %s46, 0
      %p132 = por %p130, %p131
      %s134 = sadd.s32 %s133, 1
      %p137 = scmp.eq.s32.totalorder %s40, 7
      %p138 = scmp.ne.s32.totalorder %s133, %s135
      %p139 = scmp.eq.s32.totalorder %s40, 0
      %p140 = por %p138, %p139
      %p141 = scmp.ne.s32.totalorder %s133, %s135
      %p142 = scmp.eq.s32.totalorder %s45, 7
      %p143 = por %p141, %p142
      %p144 = scmp.ne.s32.totalorder %s135, %s136
      %p145 = scmp.eq.s32.totalorder %s45, 0
      %p146 = por %p144, %p145
      %p147 = scmp.ne.s32.totalorder %s135, %s136
      %p148 = scmp.eq.s32.totalorder %s46, 7
      %p149 = por %p147, %p148
      %p151 = scmp.ne.s32.totalorder %s136, %s150
      %p152 = scmp.eq.s32.totalorder %s46, 0
      %p153 = por %p151, %p152
      %s154 = ssub.s32 %s48, %s55
      %p155 = scmp.eq.s32.totalorder %s154, 0
      %s157 = sadd.s32 %s156, 1
      %s158 = scalar_select %p155, %s156, %s157
      %p161 = pneg %p155
      %p162 = scmp.eq.s32.totalorder %s40, 7
      %p163 = por %p161, %p162
      %p164 = scmp.ne.s32.totalorder %s156, %s159
      %p165 = scmp.eq.s32.totalorder %s40, 0
      %p166 = por %p164, %p165
      %p167 = scmp.ne.s32.totalorder %s156, %s159
      %p168 = scmp.eq.s32.totalorder %s45, 7
      %p169 = por %p167, %p168
      %p170 = scmp.ne.s32.totalorder %s159, %s160
      %p171 = scmp.eq.s32.totalorder %s45, 0
      %p172 = por %p170, %p171
      %p173 = scmp.ne.s32.totalorder %s159, %s160
      %p174 = scmp.eq.s32.totalorder %s46, 7
      %p175 = por %p173, %p174
      %p177 = scmp.ne.s32.totalorder %s160, %s176
      %p178 = scmp.eq.s32.totalorder %s46, 0
      %p179 = por %p177, %p178
      %s180 = ssub.s32 %s48, %s55
      %p181 = scmp.eq.s32.totalorder %s180, 0
      %s183 = sadd.s32 %s182, 1
      %s184 = scalar_select %p181, %s182, %s183
      %p187 = pneg %p181
      %p188 = scmp.eq.s32.totalorder %s40, 7
      %p189 = por %p187, %p188
      %p190 = scmp.ne.s32.totalorder %s182, %s185
      %p191 = scmp.eq.s32.totalorder %s40, 0
      %p192 = por %p190, %p191
      %p193 = scmp.ne.s32.totalorder %s182, %s185
      %p194 = scmp.eq.s32.totalorder %s45, 7
      %p195 = por %p193, %p194
      %p196 = scmp.ne.s32.totalorder %s185, %s186
      %p197 = scmp.eq.s32.totalorder %s45, 0
      %p198 = por %p196, %p197
      %p199 = scmp.ne.s32.totalorder %s185, %s186
      %p200 = scmp.eq.s32.totalorder %s46, 7
      %p201 = por %p199, %p200
      %p203 = scmp.ne.s32.totalorder %s186, %s202
      %p204 = scmp.eq.s32.totalorder %s46, 0
      %p205 = por %p203, %p204
      %s206 = ssub.s32 %s48, %s55
      %p207 = scmp.eq.s32.totalorder %s206, 0
      %s209 = sadd.s32 %s208, 1
      %s210 = scalar_select %p207, %s208, %s209
      %p213 = pneg %p207
      %p214 = scmp.eq.s32.totalorder %s40, 7
      %p215 = por %p213, %p214
      %p216 = scmp.ne.s32.totalorder %s208, %s211
      %p217 = scmp.eq.s32.totalorder %s40, 0
      %p218 = por %p216, %p217
      %p219 = scmp.ne.s32.totalorder %s208, %s211
      %p220 = scmp.eq.s32.totalorder %s45, 7
      %p221 = por %p219, %p220
      %p222 = scmp.ne.s32.totalorder %s211, %s212
      %p223 = scmp.eq.s32.totalorder %s45, 0
      %p224 = por %p222, %p223
      %p225 = scmp.ne.s32.totalorder %s211, %s212
      %p226 = scmp.eq.s32.totalorder %s46, 7
      %p227 = por %p225, %p226
      %p229 = scmp.ne.s32.totalorder %s212, %s228
      %p230 = scmp.eq.s32.totalorder %s46, 0
      %p231 = por %p229, %p230
      %s232 = ssub.s32 %s48, %s55
      %p233 = scmp.eq.s32.totalorder %s232, 0
      %s235 = sadd.s32 %s234, 1
      %s236 = scalar_select %p233, %s234, %s235
      %p239 = pneg %p233
      %p240 = scmp.eq.s32.totalorder %s40, 7
      %p241 = por %p239, %p240
      %p242 = scmp.ne.s32.totalorder %s234, %s237
      %p243 = scmp.eq.s32.totalorder %s40, 0
      %p244 = por %p242, %p243
      %p245 = scmp.ne.s32.totalorder %s234, %s237
      %p246 = scmp.eq.s32.totalorder %s45, 7
      %p247 = por %p245, %p246
      %p248 = scmp.ne.s32.totalorder %s237, %s238
      %p249 = scmp.eq.s32.totalorder %s45, 0
      %p250 = por %p248, %p249
      %p251 = scmp.ne.s32.totalorder %s237, %s238
      %p252 = scmp.eq.s32.totalorder %s46, 7
      %p253 = por %p251, %p252
      %p255 = scmp.ne.s32.totalorder %s238, %s254
      %p256 = scmp.eq.s32.totalorder %s46, 0
      %p257 = por %p255, %p256
      %s258 = ssub.s32 %s48, %s55
      %p259 = scmp.eq.s32.totalorder %s258, 0
      %s261 = sadd.s32 %s260, 1
      %s262 = scalar_select %p259, %s260, %s261
      %p265 = pneg %p259
      %p266 = scmp.eq.s32.totalorder %s40, 7
      %p267 = por %p265, %p266
      %p268 = scmp.ne.s32.totalorder %s260, %s263
      %p269 = scmp.eq.s32.totalorder %s40, 0
      %p270 = por %p268, %p269
      %p271 = scmp.ne.s32.totalorder %s260, %s263
      %p272 = scmp.eq.s32.totalorder %s45, 7
      %p273 = por %p271, %p272
      %p274 = scmp.ne.s32.totalorder %s263, %s264
      %p275 = scmp.eq.s32.totalorder %s45, 0
      %p276 = por %p274, %p275
      %p277 = scmp.ne.s32.totalorder %s263, %s264
      %p278 = scmp.eq.s32.totalorder %s46, 7
      %p279 = por %p277, %p278
      %p281 = scmp.ne.s32.totalorder %s264, %s280
      %p282 = scmp.eq.s32.totalorder %s46, 0
      %p283 = por %p281, %p282
      %s284 = ssub.s32 %s48, %s55
      %p285 = scmp.eq.s32.totalorder %s284, 0
      %s287 = sadd.s32 %s286, 1
      %s288 = scalar_select %p285, %s286, %s287
      %p291 = pneg %p285
      %p292 = scmp.eq.s32.totalorder %s40, 7
      %p293 = por %p291, %p292
      %p294 = scmp.ne.s32.totalorder %s286, %s289
      %p295 = scmp.eq.s32.totalorder %s40, 0
      %p296 = por %p294, %p295
      %p297 = scmp.ne.s32.totalorder %s286, %s289
      %p298 = scmp.eq.s32.totalorder %s45, 7
      %p299 = por %p297, %p298
      %p300 = scmp.ne.s32.totalorder %s289, %s290
      %p301 = scmp.eq.s32.totalorder %s45, 0
      %p302 = por %p300, %p301
      %p303 = scmp.ne.s32.totalorder %s289, %s290
      %p304 = scmp.eq.s32.totalorder %s46, 7
      %p305 = por %p303, %p304
      %p307 = scmp.ne.s32.totalorder %s290, %s306
      %p308 = scmp.eq.s32.totalorder %s46, 0
      %p309 = por %p307, %p308
      %s310 = ssub.s32 %s48, %s55
      %p311 = scmp.eq.s32.totalorder %s310, 0
      %s313 = sadd.s32 %s312, 1
      %s314 = scalar_select %p311, %s312, %s313
      %p317 = pneg %p311
      %p318 = scmp.eq.s32.totalorder %s40, 7
      %p319 = por %p317, %p318
      %p320 = scmp.ne.s32.totalorder %s312, %s315
      %p321 = scmp.eq.s32.totalorder %s40, 0
      %p322 = por %p320, %p321
      %p323 = scmp.ne.s32.totalorder %s312, %s315
      %p324 = scmp.eq.s32.totalorder %s45, 7
      %p325 = por %p323, %p324
      %p326 = scmp.ne.s32.totalorder %s315, %s316
      %p327 = scmp.eq.s32.totalorder %s45, 0
      %p328 = por %p326, %p327
      %p329 = scmp.ne.s32.totalorder %s315, %s316
      %p330 = scmp.eq.s32.totalorder %s46, 7
      %p331 = por %p329, %p330
      %p333 = scmp.ne.s32.totalorder %s316, %s332
      %p334 = scmp.eq.s32.totalorder %s46, 0
      %p335 = por %p333, %p334
      %s337 = sadd.s32 %s336, 1
      %p340 = scmp.eq.s32.totalorder %s40, 7
      %p341 = scmp.ne.s32.totalorder %s336, %s338
      %p342 = scmp.eq.s32.totalorder %s40, 0
      %p343 = por %p341, %p342
      %p344 = scmp.ne.s32.totalorder %s336, %s338
      %p345 = scmp.eq.s32.totalorder %s45, 7
      %p346 = por %p344, %p345
      %p347 = scmp.ne.s32.totalorder %s338, %s339
      %p348 = scmp.eq.s32.totalorder %s45, 0
      %p349 = por %p347, %p348
      %p350 = scmp.ne.s32.totalorder %s338, %s339
      %p351 = scmp.eq.s32.totalorder %s46, 7
      %p352 = por %p350, %p351
      %p354 = scmp.ne.s32.totalorder %s339, %s353
      %p355 = scmp.eq.s32.totalorder %s46, 0
      %p356 = por %p354, %p355
      %s358 = sadd.s32 %s357, 1
      %p361 = scmp.eq.s32.totalorder %s40, 7
      %p362 = scmp.ne.s32.totalorder %s357, %s359
      %p363 = scmp.eq.s32.totalorder %s40, 0
      %p364 = por %p362, %p363
      %p365 = scmp.ne.s32.totalorder %s357, %s359
      %p366 = scmp.eq.s32.totalorder %s45, 7
      %p367 = por %p365, %p366
      %p368 = scmp.ne.s32.totalorder %s359, %s360
      %p369 = scmp.eq.s32.totalorder %s45, 0
      %p370 = por %p368, %p369
      %p371 = scmp.ne.s32.totalorder %s359, %s360
      %p372 = scmp.eq.s32.totalorder %s46, 7
      %p373 = por %p371, %p372
      %p375 = scmp.ne.s32.totalorder %s360, %s374
      %p376 = scmp.eq.s32.totalorder %s46, 0
      %p377 = por %p375, %p376
      %s379 = sadd.s32 %s378, 1
      %p382 = scmp.eq.s32.totalorder %s40, 7
      %p383 = scmp.ne.s32.totalorder %s378, %s380
      %p384 = scmp.eq.s32.totalorder %s40, 0
      %p385 = por %p383, %p384
      %p386 = scmp.ne.s32.totalorder %s378, %s380
      %p387 = scmp.eq.s32.totalorder %s45, 7
      %p388 = por %p386, %p387
      %p389 = scmp.ne.s32.totalorder %s380, %s381
      %p390 = scmp.eq.s32.totalorder %s45, 0
      %p391 = por %p389, %p390
      %p392 = scmp.ne.s32.totalorder %s380, %s381
      %p393 = scmp.eq.s32.totalorder %s46, 7
      %p394 = por %p392, %p393
      %p396 = scmp.ne.s32.totalorder %s381, %s395
      %p397 = scmp.eq.s32.totalorder %s46, 0
      %p398 = por %p396, %p397
      %s400 = sadd.s32 %s399, 1
      %p403 = scmp.eq.s32.totalorder %s40, 7
      %p404 = scmp.ne.s32.totalorder %s399, %s401
      %p405 = scmp.eq.s32.totalorder %s40, 0
      %p406 = por %p404, %p405
      %p407 = scmp.ne.s32.totalorder %s399, %s401
      %p408 = scmp.eq.s32.totalorder %s45, 7
      %p409 = por %p407, %p408
      %p410 = scmp.ne.s32.totalorder %s401, %s402
      %p411 = scmp.eq.s32.totalorder %s45, 0
      %p412 = por %p410, %p411
      %p413 = scmp.ne.s32.totalorder %s401, %s402
      %p414 = scmp.eq.s32.totalorder %s46, 7
      %p415 = por %p413, %p414
      %p417 = scmp.ne.s32.totalorder %s402, %s416
      %p418 = scmp.eq.s32.totalorder %s46, 0
      %p419 = por %p417, %p418
      %s421 = sadd.s32 %s420, 1
      %p424 = scmp.eq.s32.totalorder %s40, 7
      %p425 = scmp.ne.s32.totalorder %s420, %s422
      %p426 = scmp.eq.s32.totalorder %s40, 0
      %p427 = por %p425, %p426
      %p428 = scmp.ne.s32.totalorder %s420, %s422
      %p429 = scmp.eq.s32.totalorder %s45, 7
      %p430 = por %p428, %p429
      %p431 = scmp.ne.s32.totalorder %s422, %s423
      %p432 = scmp.eq.s32.totalorder %s45, 0
      %p433 = por %p431, %p432
      %p434 = scmp.ne.s32.totalorder %s422, %s423
      %p435 = scmp.eq.s32.totalorder %s46, 7
      %p436 = por %p434, %p435
      %p438 = scmp.ne.s32.totalorder %s423, %s437
      %p439 = scmp.eq.s32.totalorder %s46, 0
      %p440 = por %p438, %p439
      %s441 = ssub.s32 %s47, %s59
      %p442 = scmp.eq.s32.totalorder %s441, 0
      %s444 = sadd.s32 %s443, 1
      %s445 = scalar_select %p442, %s443, %s444
      %p448 = pneg %p442
      %p449 = scmp.eq.s32.totalorder %s40, 7
      %p450 = por %p448, %p449
      %p451 = scmp.ne.s32.totalorder %s443, %s446
      %p452 = scmp.eq.s32.totalorder %s40, 0
      %p453 = por %p451, %p452
      %p454 = scmp.ne.s32.totalorder %s443, %s446
      %p455 = scmp.eq.s32.totalorder %s45, 7
      %p456 = por %p454, %p455
      %p457 = scmp.ne.s32.totalorder %s446, %s447
      %p458 = scmp.eq.s32.totalorder %s45, 0
      %p459 = por %p457, %p458
      %p460 = scmp.ne.s32.totalorder %s446, %s447
      %p461 = scmp.eq.s32.totalorder %s46, 7
      %p462 = por %p460, %p461
      %p464 = scmp.ne.s32.totalorder %s447, %s463
      %p465 = scmp.eq.s32.totalorder %s46, 0
      %p466 = por %p464, %p465
      %p467 = scmp.le.s32.totalorder 1, %s40
      %p468 = scmp.lt.s32.totalorder %s40, 9
      %p469 = pnand %p467, %p468
      %p470 = pneg %p469
      // Predicated region
      $region9: #{_lambda_.1} parent=5 // pred_check
        _
      $region10: #{_lambda_.1} parent=5 // pred_check_branch
        %472 = sbr.rel (%p469) target = $region12
      $region11: #{_lambda_.1} parent=5 // pred_region
        %s473 = ssub.s32 %s40, 1
        // Predicated region
        $region13: #{_lambda_.1} parent=11 // pred_check
          %p474 = pneg %p125
        $region14: #{_lambda_.1} parent=11 // pred_check_branch
          %476 = sbr.rel (%p474) target = $region16
        $region15: #{_lambda_.1} parent=11 // pred_region
          _
        $region16: #{_lambda_.1} parent=11 // pred_fallthru
          _
        // Predicated region
        $region17: #{_lambda_.1} parent=11 // pred_check
          %p477 = pneg %p146
        $region18: #{_lambda_.1} parent=11 // pred_check_branch
          %479 = sbr.rel (%p477) target = $region20
        $region19: #{_lambda_.1} parent=11 // pred_region
          _
        $region20: #{_lambda_.1} parent=11 // pred_fallthru
          _
        // Predicated region
        $region21: #{_lambda_.1} parent=11 // pred_check
          %p480 = pneg %p349
        $region22: #{_lambda_.1} parent=11 // pred_check_branch
          %482 = sbr.rel (%p480) target = $region24
        $region23: #{_lambda_.1} parent=11 // pred_region
          _
        $region24: #{_lambda_.1} parent=11 // pred_fallthru
          _
        // Predicated region
        $region25: #{_lambda_.1} parent=11 // pred_check
          %p483 = pneg %p370
        $region26: #{_lambda_.1} parent=11 // pred_check_branch
          %485 = sbr.rel (%p483) target = $region28
        $region27: #{_lambda_.1} parent=11 // pred_region
          _
        $region28: #{_lambda_.1} parent=11 // pred_fallthru
          _
        // Predicated region
        $region29: #{_lambda_.1} parent=11 // pred_check
          %p486 = pneg %p391
        $region30: #{_lambda_.1} parent=11 // pred_check_branch
          %488 = sbr.rel (%p486) target = $region32
        $region31: #{_lambda_.1} parent=11 // pred_region
          %s490 = ssub.s32 16, 16
          %491 = vsyncadd [#allocation10], %s490
          %s493 = sshll.u32 [#allocation11], 4
          %s494 = int_to_ptr.vmem [resolvable:$true] %s493
          %496 = dma.hbm_to_vmem [thread:$0]  %s15, 16, %s494, [#allocation10]
        $region32: #{_lambda_.1} parent=11 // pred_fallthru
          _
        // Predicated region
        $region33: #{_lambda_.1} parent=11 // pred_check
          %p497 = pneg %p412
        $region34: #{_lambda_.1} parent=11 // pred_check_branch
          %499 = sbr.rel (%p497) target = $region36
        $region35: #{_lambda_.1} parent=11 // pred_region
          _
        $region36: #{_lambda_.1} parent=11 // pred_fallthru
          _
        // Predicated region
        $region37: #{_lambda_.1} parent=11 // pred_check
          %p500 = pneg %p433
        $region38: #{_lambda_.1} parent=11 // pred_check_branch
          %502 = sbr.rel (%p500) target = $region40
        $region39: #{_lambda_.1} parent=11 // pred_region
          _
        $region40: #{_lambda_.1} parent=11 // pred_fallthru
          _
      $region12: #{_lambda_.1} parent=5 // pred_fallthru
        _
      %p503 = scmp.lt.s32.totalorder %s40, 8
      // Predicated region
      $region41: #{_lambda_.1} parent=5 // pred_check
        %p504 = pneg %p503
      $region42: #{_lambda_.1} parent=5 // pred_check_branch
        %506 = sbr.rel (%p504) target = $region44
      $region43: #{_lambda_.1} parent=5 // pred_region
        // Predicated region
        $region45: #{_lambda_.1} parent=43 // pred_check
          %p507 = pneg %p72
        $region46: #{_lambda_.1} parent=43 // pred_check_branch
          %509 = sbr.rel (%p507) target = $region48
        $region47: #{_lambda_.1} parent=43 // pred_region
          %p510 = scmp.lt.s32.totalorder %s47, 1
          %s511 = scalar_select %p510, %s47, 1
          %s512 = smul.addr %s511, 2
          %s513 = smul.addr %s512, 8
          %s514 = scalar_lea.vmem %s2, %s513
        $region48: #{_lambda_.1} parent=43 // pred_fallthru
          _
        // Predicated region
        $region49: #{_lambda_.1} parent=43 // pred_check
          %p515 = pneg %p98
        $region50: #{_lambda_.1} parent=43 // pred_check_branch
          %517 = sbr.rel (%p515) target = $region52
        $region51: #{_lambda_.1} parent=43 // pred_region
          %p518 = scmp.lt.s32.totalorder %s47, 1
          %s519 = scalar_select %p518, %s47, 1
          %s520 = smul.addr %s519, 2
          %s521 = smul.addr %s520, 8
          %s522 = scalar_lea.vmem %s3, %s521
        $region52: #{_lambda_.1} parent=43 // pred_fallthru
          _
        // Predicated region
        $region53: #{_lambda_.1} parent=43 // pred_check
          %p523 = pneg %p166
        $region54: #{_lambda_.1} parent=43 // pred_check_branch
          %525 = sbr.rel (%p523) target = $region56
        $region55: #{_lambda_.1} parent=43 // pred_region
          %s526 = sand.u32 %s156, 1
          %s527 = scalar_lea.sflag [#allocation8], %s526
          %s528 = sand.u32 %s156, 1
          %s529 = smul.addr %s528, 80
          %s530 = scalar_lea.vmem [#allocation7], %s529
          %s532 = ssub.s32 1280, 1280
          %533 = vsyncadd %s527, %s532
          %s534 = smul.addr %s48, 10
          %s535 = smul.addr %s534, 128
          %s536 = scalar_lea.hbm %s6, %s535
          %s537 = sshll.u32 %s530, 4
          %s538 = int_to_ptr.vmem [resolvable:$true] %s537
          %543 = dma.hbm_to_vmem [thread:$0]  %s536, 1280, %s538, %s527, 128, 128, 8
        $region56: #{_lambda_.1} parent=43 // pred_fallthru
          _
        // Predicated region
        $region57: #{_lambda_.1} parent=43 // pred_check
          %p544 = pneg %p192
        $region58: #{_lambda_.1} parent=43 // pred_check_branch
          %546 = sbr.rel (%p544) target = $region60
        $region59: #{_lambda_.1} parent=43 // pred_region
          %p547 = scmp.lt.s32.totalorder %s48, 3
          %s548 = scalar_select %p547, %s48, 3
          %s549 = scalar_lea.vmem %s7, %s548
        $region60: #{_lambda_.1} parent=43 // pred_fallthru
          _
        // Predicated region
        $region61: #{_lambda_.1} parent=43 // pred_check
          %p550 = pneg %p218
        $region62: #{_lambda_.1} parent=43 // pred_check_branch
          %552 = sbr.rel (%p550) target = $region64
        $region63: #{_lambda_.1} parent=43 // pred_region
          %s553 = sand.u32 %s40, 1
          %s554 = scalar_lea.sflag [#allocation10], %s553
          %s555 = sand.u32 %s208, 1
          %s556 = smul.addr %s555, 80
          %s557 = scalar_lea.vmem [#allocation9], %s556
          %s559 = ssub.s32 1280, 1280
          %560 = vsyncadd %s554, %s559
          %s561 = smul.addr %s48, 10
          %s562 = smul.addr %s561, 128
          %s563 = scalar_lea.hbm %s8, %s562
          %s564 = sshll.u32 %s557, 4
          %s565 = int_to_ptr.vmem [resolvable:$true] %s564
          %570 = dma.hbm_to_vmem [thread:$0]  %s563, 1280, %s565, %s554, 128, 128, 8
        $region64: #{_lambda_.1} parent=43 // pred_fallthru
          _
        // Predicated region
        $region65: #{_lambda_.1} parent=43 // pred_check
          %p571 = pneg %p244
        $region66: #{_lambda_.1} parent=43 // pred_check_branch
          %573 = sbr.rel (%p571) target = $region68
        $region67: #{_lambda_.1} parent=43 // pred_region
          %p574 = scmp.lt.s32.totalorder %s48, 3
          %s575 = scalar_select %p574, %s48, 3
          %s576 = scalar_lea.vmem %s9, %s575
        $region68: #{_lambda_.1} parent=43 // pred_fallthru
          _
        // Predicated region
        $region69: #{_lambda_.1} parent=43 // pred_check
          %p577 = pneg %p270
        $region70: #{_lambda_.1} parent=43 // pred_check_branch
          %579 = sbr.rel (%p577) target = $region72
        $region71: #{_lambda_.1} parent=43 // pred_region
          %p580 = scmp.lt.s32.totalorder %s48, 3
          %s581 = scalar_select %p580, %s48, 3
          %s582 = smul.addr %s581, 2
          %s583 = smul.addr %s582, 8
          %s584 = scalar_lea.vmem %s10, %s583
        $region72: #{_lambda_.1} parent=43 // pred_fallthru
          _
        // Predicated region
        $region73: #{_lambda_.1} parent=43 // pred_check
          %p585 = pneg %p296
        $region74: #{_lambda_.1} parent=43 // pred_check_branch
          %587 = sbr.rel (%p585) target = $region76
        $region75: #{_lambda_.1} parent=43 // pred_region
          %p588 = scmp.lt.s32.totalorder %s48, 3
          %s589 = scalar_select %p588, %s48, 3
          %s590 = scalar_lea.vmem %s11, %s589
        $region76: #{_lambda_.1} parent=43 // pred_fallthru
          _
        // Predicated region
        $region77: #{_lambda_.1} parent=43 // pred_check
          %p591 = pneg %p322
        $region78: #{_lambda_.1} parent=43 // pred_check_branch
          %593 = sbr.rel (%p591) target = $region80
        $region79: #{_lambda_.1} parent=43 // pred_region
          %p594 = scmp.lt.s32.totalorder %s48, 3
          %s595 = scalar_select %p594, %s48, 3
          %s596 = smul.addr %s595, 2
          %s597 = smul.addr %s596, 8
          %s598 = scalar_lea.vmem %s12, %s597
        $region80: #{_lambda_.1} parent=43 // pred_fallthru
          _
      $region44: #{_lambda_.1} parent=5 // pred_fallthru
        _
      %p599 = scmp.le.s32.totalorder 1, %s40
      %p600 = scmp.lt.s32.totalorder %s40, 9
      %p601 = pnand %p599, %p600
      %p602 = pneg %p601
      // Predicated region
      $region81: #{_lambda_.1} parent=5 // pred_check
        _
      $region82: #{_lambda_.1} parent=5 // pred_check_branch
        %604 = sbr.rel (%p601) target = $region84
      $region83: #{_lambda_.1} parent=5 // pred_region
        %s605 = ssub.s32 %s40, 1
        %s606 = sand.u32 %s159, 1
        %s607 = scalar_lea.sflag [#allocation8], %s606
        %s608 = sand.u32 %s159, 1
        %s609 = smul.addr %s608, 80
        %s610 = scalar_lea.vmem [#allocation7], %s609
        // Predicated region
        $region85: #{_lambda_.1} parent=83 // pred_check
          %p611 = pneg %p172
        $region86: #{_lambda_.1} parent=83 // pred_check_branch
          %613 = sbr.rel (%p611) target = $region88
        $region87: #{_lambda_.1} parent=83 // pred_region
          %614 = dma.done %s607, 1280
        $region88: #{_lambda_.1} parent=83 // pred_fallthru
          _
        %s615 = sand.u32 %s45, 1
        %s616 = scalar_lea.sflag [#allocation10], %s615
        %s617 = sand.u32 %s211, 1
        %s618 = smul.addr %s617, 80
        %s619 = scalar_lea.vmem [#allocation9], %s618
        // Predicated region
        $region89: #{_lambda_.1} parent=83 // pred_check
          %p620 = pneg %p224
        $region90: #{_lambda_.1} parent=83 // pred_check_branch
          %622 = sbr.rel (%p620) target = $region92
        $region91: #{_lambda_.1} parent=83 // pred_region
          %623 = dma.done %s616, 1280
        $region92: #{_lambda_.1} parent=83 // pred_fallthru
          _
        // Predicated region
        $region93: #{_lambda_.1} parent=83 // pred_check
          %p624 = pneg %p391
        $region94: #{_lambda_.1} parent=83 // pred_check_branch
          %626 = sbr.rel (%p624) target = $region96
        $region95: #{_lambda_.1} parent=83 // pred_region
          %627 = dma.done [#allocation10], 16
        $region96: #{_lambda_.1} parent=83 // pred_fallthru
          _
        %p628 = scmp.lt.s32.totalorder %s49, 1
        %s629 = scalar_select %p628, %s49, 1
        %s630 = smul.addr %s629, 2
        %s631 = smul.addr %s630, 8
        %s632 = scalar_lea.vmem %s2, %s631
        %p633 = pneg %p78
        %p634 = pneg %p75
        %p635 = scmp.lt.s32.totalorder %s49, 1
        %s636 = scalar_select %p635, %s49, 1
        %s637 = smul.addr %s636, 2
        %s638 = smul.addr %s637, 8
        %s639 = scalar_lea.vmem %s3, %s638
        %p640 = pneg %p104
        %p641 = pneg %p101
        %p642 = pneg %p125
        %p643 = pneg %p122
        %p644 = pneg %p146
        %p645 = pneg %p143
        %s646 = sand.u32 %s159, 1
        %s647 = scalar_lea.sflag [#allocation8], %s646
        %s648 = sand.u32 %s159, 1
        %s649 = smul.addr %s648, 80
        %s650 = scalar_lea.vmem [#allocation7], %s649
        %p651 = pneg %p172
        %p652 = pneg %p169
        %p653 = scmp.lt.s32.totalorder %s50, 3
        %s654 = scalar_select %p653, %s50, 3
        %s655 = scalar_lea.vmem %s7, %s654
        %p656 = pneg %p198
        %p657 = pneg %p195
        %s658 = sand.u32 %s45, 1
        %s659 = scalar_lea.sflag [#allocation10], %s658
        %s660 = sand.u32 %s211, 1
        %s661 = smul.addr %s660, 80
        %s662 = scalar_lea.vmem [#allocation9], %s661
        %p663 = pneg %p224
        %p664 = pneg %p221
        %p665 = scmp.lt.s32.totalorder %s50, 3
        %s666 = scalar_select %p665, %s50, 3
        %s667 = scalar_lea.vmem %s9, %s666
        %p668 = pneg %p250
        %p669 = pneg %p247
        %p670 = scmp.lt.s32.totalorder %s50, 3
        %s671 = scalar_select %p670, %s50, 3
        %s672 = smul.addr %s671, 2
        %s673 = smul.addr %s672, 8
        %s674 = scalar_lea.vmem %s10, %s673
        %p675 = pneg %p276
        %p676 = pneg %p273
        %p677 = scmp.lt.s32.totalorder %s50, 3
        %s678 = scalar_select %p677, %s50, 3
        %s679 = scalar_lea.vmem %s11, %s678
        %p680 = pneg %p302
        %p681 = pneg %p299
        %p682 = scmp.lt.s32.totalorder %s50, 3
        %s683 = scalar_select %p682, %s50, 3
        %s684 = smul.addr %s683, 2
        %s685 = smul.addr %s684, 8
        %s686 = scalar_lea.vmem %s12, %s685
        %p687 = pneg %p328
        %p688 = pneg %p325
        %p689 = pneg %p349
        %p690 = pneg %p346
        %p691 = pneg %p370
        %p692 = pneg %p367
        %p693 = pneg %p391
        %p694 = pneg %p388
        %p695 = pneg %p412
        %p696 = pneg %p409
        %p697 = pneg %p433
        %p698 = pneg %p430
        %p699 = pneg %p459
        %p700 = pneg %p456
        %p701 = scmp.lt.s32.totalorder %s49, 1
        %s702 = scalar_select %p701, %s49, 1
        %s703 = smul.addr %s702, 2
        %s704 = smul.addr %s703, 8
        %s705 = scalar_lea.vmem %s18, %s704
        %p706 = scmp.lt.s32.totalorder %s49, 1
        %s707 = scalar_select %p706, %s49, 1
        %s708 = smul.addr %s707, 2
        %s709 = smul.addr %s708, 8
        %s710 = scalar_lea.vmem %s2, %s709
        %p711 = scmp.lt.s32.totalorder %s49, 1
        %s712 = scalar_select %p711, %s49, 1
        %s713 = smul.addr %s712, 2
        %s714 = smul.addr %s713, 8
        %s715 = scalar_lea.vmem %s3, %s714
        %p716 = scmp.lt.s32.totalorder %s50, 3
        %s717 = scalar_select %p716, %s50, 3
        %s718 = scalar_lea.vmem %s7, %s717
        %p719 = scmp.lt.s32.totalorder %s50, 3
        %s720 = scalar_select %p719, %s50, 3
        %s721 = scalar_lea.vmem %s9, %s720
        %p722 = scmp.lt.s32.totalorder %s50, 3
        %s723 = scalar_select %p722, %s50, 3
        %s724 = smul.addr %s723, 2
        %s725 = smul.addr %s724, 8
        %s726 = scalar_lea.vmem %s10, %s725
        %p727 = scmp.lt.s32.totalorder %s50, 3
        %s728 = scalar_select %p727, %s50, 3
        %s729 = scalar_lea.vmem %s11, %s728
        %p730 = scmp.lt.s32.totalorder %s50, 3
        %s731 = scalar_select %p730, %s50, 3
        %s732 = smul.addr %s731, 2
        %s733 = smul.addr %s732, 8
        %s734 = scalar_lea.vmem %s12, %s733
        %p735 = scmp.lt.s32.totalorder %s49, 1
        %s736 = scalar_select %p735, %s49, 1
        %s737 = smul.addr %s736, 2
        %s738 = smul.addr %s737, 8
        %s739 = scalar_lea.vmem %s18, %s738
        %s740 = sld [smem:[#allocation5 + %s49]]
        %v741 = vlaneseq
        %v742 = vshrl.u32 %v741, 7
        %v743 = vadd.s32 %v742, 8
        %v744 = vstv %s740
        %vm745 = vcmp.lt.s32.totalorder %v742, %v744
        %vm746 = vcmp.lt.s32.totalorder %v743, %v744
        %v747 = vsel %vm745, 1, 0
        %v748 = vsel %vm746, 1, 0
        %v749 = vcvt.s32.f32 %v747
        %v750 = vcvt.s32.f32 %v748
        %p751 = scmp.eq.s32.totalorder %s50, 0
        // Predicated region
        $region97: #{_lambda_.1} parent=83 // pred_check
          %p752 = pneg %p751
        $region98: #{_lambda_.1} parent=83 // pred_check_branch
          %754 = sbr.rel (%p752) target = $region100
        $region99: #{_lambda_.1} parent=83 // pred_region
          %v755 = vld [vmem:[%s710] sm:$0xff]
          %v756 = vld [vmem:[%s710 + $0x8] sm:$0xff]
          %v757 = vld [vmem:[%s4] sm:$0xff]
          %v758 = vld [vmem:[%s5] sm:$0x1]
          %v760 = vlaneseq
          %v761 = vshrl.u32 %v760, 7
          %v762 = vsub.s32 0, %v761
          %v763 = vrot.slane %v758, %v762
          %vm765 = vcmask 64512
          %v767 = vsel %vm765, %v755, 0
          %v770 = vsel %vm765, %v756, 0
          %772 = vmatprep.subr.mxu0 0.0
          %773 = vmatpush1.msra.mxu0 %v757
          %774 = vmatprep.subr.mxu0 0.0
          %775 = vmatpush1.msra.mxu0 0.0
          %776 = vmatprep.subr.mxu0 0.0
          %777 = vmatpush1.msra.mxu0 0.0
          %778 = vmatprep.subr.mxu0 0.0
          %779 = vmatpush1.msra.mxu0 0.0
          %780 = vmatprep.subr.mxu0 0.0
          %781 = vmatpush1.msra.mxu0 0.0
          %782 = vmatprep.subr.mxu0 0.0
          %783 = vmatpush1.msra.mxu0 0.0
          %784 = vmatprep.subr.mxu0 0.0
          %785 = vmatpush1.msra.mxu0 0.0
          %786 = vmatprep.subr.mxu0 0.0
          %787 = vmatpush1.msra.mxu0 0.0
          %788 = vmatprep.subr.mxu0 0.0
          %789 = vmatpush1.msra.mxu0 0.0
          %790 = vmatprep.subr.mxu0 0.0
          %791 = vmatpush1.msra.mxu0 0.0
          %792 = vmatprep.subr.mxu0 0.0
          %793 = vmatpush1.msra.mxu0 0.0
          %794 = vmatprep.subr.mxu0 0.0
          %795 = vmatpush1.msra.mxu0 0.0
          %796 = vmatprep.subr.mxu0 0.0
          %797 = vmatpush1.msra.mxu0 0.0
          %798 = vmatprep.subr.mxu0 0.0
          %799 = vmatpush1.msra.mxu0 0.0
          %800 = vmatprep.subr.mxu0 0.0
          %801 = vmatpush1.msra.mxu0 0.0
          %802 = vmatprep.subr.mxu0 0.0
          %803 = vmatpush1.msra.mxu0 0.0
          %804 = vmatprep.subr.mxu0 0.0
          %805 = vmatpush1.msra.mxu0 0.0
          %806 = vmatprep.subr.mxu0 0.0
          %807 = vmatpush1.msra.mxu0 0.0
          %808 = vmatprep.subr.mxu0 0.0
          %809 = vmatpush1.msra.mxu0 0.0
          %810 = vmatprep.subr.mxu0 0.0
          %811 = vmatpush1.msra.mxu0 0.0
          %812 = vmatprep.subr.mxu0 0.0
          %813 = vmatpush1.msra.mxu0 0.0
          %814 = vmatprep.subr.mxu0 0.0
          %815 = vmatpush1.msra.mxu0 0.0
          %816 = vmatprep.subr.mxu0 0.0
          %817 = vmatpush1.msra.mxu0 0.0
          %818 = vmatprep.subr.mxu0 0.0
          %819 = vmatpush1.msra.mxu0 0.0
          %820 = vmatprep.subr.mxu0 0.0
          %821 = vmatpush1.msra.mxu0 0.0
          %822 = vmatprep.subr.mxu0 0.0
          %823 = vmatpush1.msra.mxu0 0.0
          %824 = vmatprep.subr.mxu0 0.0
          %825 = vmatpush1.msra.mxu0 0.0
          %826 = vmatprep.subr.mxu0 0.0
          %827 = vmatpush1.msra.mxu0 0.0
          %828 = vmatprep.subr.mxu0 0.0
          %829 = vmatpush1.msra.mxu0 0.0
          %830 = vmatprep.subr.mxu0 0.0
          %831 = vmatpush1.msra.mxu0 0.0
          %832 = vmatprep.subr.mxu0 0.0
          %833 = vmatpush1.msra.mxu0 0.0
          %834 = vmatprep.subr.mxu0 0.0
          %835 = vmatpush1.msra.mxu0 0.0
          %836 = vmatprep.mubr.f32.mxu0 0.0
          %837 = vmatmul.mubr.f32.gmra.mrb[0].mxu0 %v767
          %v838 = vpop.f32.mrb[0].mxu0
          %v839 = vadd.f32 %v763, %v838
          %v840 = vpop.f32.mrb[0].mxu0
          %841 = vmatprep.mubr.f32.mxu0 0.0
          %842 = vmatmul.mubr.f32.gmra.mrb[0].mxu0 %v770
          %v843 = vpop.f32.mrb[0].mxu0
          %v844 = vadd.f32 %v763, %v843
          %v845 = vpop.f32.mrb[0].mxu0
          %846 = vdwg.mxu0
          %v847 = vmul.f32 %v839, %v749
          %v848 = vmul.f32 %v844, %v750
          %vm849 = vcmask 130048
          %850 = vst.msk [vmem:[#allocation2] sm:$0xff] %vm849, 0.0
          %851 = vst.msk [vmem:[#allocation2 + $0x18] sm:$0xff] %vm849, 0.0
          %852 = vst.msk [vmem:[#allocation2 + $0x8] sm:$0xff] %vm849, %v847
          %853 = vst.msk [vmem:[#allocation2 + $0x10] sm:$0xff] %vm849, %v848
          %854 = vst.msk [vmem:[#allocation3] sm:$0xff] %vm849, 0.0
          %855 = vst.msk [vmem:[#allocation3 + $0x8] sm:$0xff] %vm849, 0.0
        $region100: #{_lambda_.1} parent=83 // pred_fallthru
          _
        %v856 = vld [vmem:[#allocation2 + $0x6] sm:$0xff]
        %v857 = vld [vmem:[#allocation2 + $0xe] sm:$0xff]
        %v858 = vld [vmem:[#allocation2 + $0x7] sm:$0xff]
        %v859 = vld [vmem:[#allocation2 + $0xf] sm:$0xff]
        %v860 = vld [vmem:[#allocation2 + $0x8] sm:$0xff]
        %v861 = vld [vmem:[#allocation2 + $0x10] sm:$0xff]
        %v862 = vld [vmem:[#allocation2 + $0x9] sm:$0xff]
        %v863 = vld [vmem:[#allocation2 + $0x11] sm:$0xff]
        %v864 = vld [vmem:[#allocation2 + $0xa] sm:$0xff]
        %v865 = vld [vmem:[#allocation2 + $0x12] sm:$0xff]
        %868 = vrot.lane.b32.xlu0 %v858, 16
        %v869 = vpop.permute.xlu0 %868
        %870 = vrot.lane.b32.xlu0 %v859, 16
        %v871 = vpop.permute.xlu0 %870
        %876 = vrot.lane.b32.xlu0 %v860, 32
        %v877 = vpop.permute.xlu0 %876
        %878 = vrot.lane.b32.xlu0 %v861, 32
        %v879 = vpop.permute.xlu0 %878
        %884 = vrot.lane.b32.xlu0 %v862, 48
        %v885 = vpop.permute.xlu0 %884
        %886 = vrot.lane.b32.xlu0 %v863, 48
        %v887 = vpop.permute.xlu0 %886
        %892 = vrot.lane.b32.xlu0 %v864, 64
        %v893 = vpop.permute.xlu0 %892
        %894 = vrot.lane.b32.xlu0 %v865, 64
        %v895 = vpop.permute.xlu0 %894
        %vm898 = vcmask 130048
        %v899 = vsel %vm898, %v856, %v869
        %v900 = vsel %vm898, %v857, %v871
        %vm901 = vcmask 261120
        %v902 = vsel %vm901, %v899, %v877
        %v903 = vsel %vm901, %v900, %v879
        %vm904 = vcmask 392192
        %v905 = vsel %vm904, %v902, %v885
        %v906 = vsel %vm904, %v903, %v887
        %vm907 = vcmask 523264
        %v908 = vsel %vm907, %v905, %v893
        %v909 = vsel %vm907, %v906, %v895
        %v910 = vld [vmem:[%s610] sm:$0xff]
        %v911 = vld [vmem:[%s610 + $0x8] sm:$0xff]
        %v912 = vld [vmem:[%s610 + $0x10] sm:$0xff]
        %v913 = vld [vmem:[%s610 + $0x18] sm:$0xff]
        %v914 = vld [vmem:[%s610 + $0x20] sm:$0xff]
        %v915 = vld [vmem:[%s610 + $0x28] sm:$0xff]
        %v916 = vld [vmem:[%s610 + $0x30] sm:$0xff]
        %v917 = vld [vmem:[%s610 + $0x38] sm:$0xff]
        %v918 = vld [vmem:[%s610 + $0x40] sm:$0xff]
        %v919 = vld [vmem:[%s610 + $0x48] sm:$0xff]
        %v920 = vld [vmem:[%s718] sm:$0x1]
        %v922 = vlaneseq
        %v923 = vshrl.u32 %v922, 7
        %v924 = vsub.s32 0, %v923
        %v925 = vrot.slane %v920, %v924
        %vm927 = vcmask 654336
        %v929 = vsel %vm927, %v908, 0
        %v932 = vsel %vm927, %v909, 0
        %934 = vmatprep.subr.mxu0 0.0
        %935 = vmatpush1.msra.mxu0 %v910
        %936 = vmatprep.subr.mxu0 0.0
        %937 = vmatpush1.msra.mxu0 %v911
        %938 = vmatprep.subr.mxu0 0.0
        %939 = vmatpush1.msra.mxu0 %v912
        %940 = vmatprep.subr.mxu0 0.0
        %941 = vmatpush1.msra.mxu0 %v913
        %942 = vmatprep.subr.mxu0 0.0
        %943 = vmatpush1.msra.mxu0 %v914
        %944 = vmatprep.subr.mxu0 0.0
        %945 = vmatpush1.msra.mxu0 %v915
        %946 = vmatprep.subr.mxu0 0.0
        %947 = vmatpush1.msra.mxu0 %v916
        %948 = vmatprep.subr.mxu0 0.0
        %949 = vmatpush1.msra.mxu0 %v917
        %950 = vmatprep.subr.mxu0 0.0
        %951 = vmatpush1.msra.mxu0 %v918
        %952 = vmatprep.subr.mxu0 0.0
        %953 = vmatpush1.msra.mxu0 %v919
        %954 = vmatprep.subr.mxu0 0.0
        %955 = vmatpush1.msra.mxu0 0.0
        %956 = vmatprep.subr.mxu0 0.0
        %957 = vmatpush1.msra.mxu0 0.0
        %958 = vmatprep.subr.mxu0 0.0
        %959 = vmatpush1.msra.mxu0 0.0
        %960 = vmatprep.subr.mxu0 0.0
        %961 = vmatpush1.msra.mxu0 0.0
        %962 = vmatprep.subr.mxu0 0.0
        %963 = vmatpush1.msra.mxu0 0.0
        %964 = vmatprep.subr.mxu0 0.0
        %965 = vmatpush1.msra.mxu0 0.0
        %966 = vmatprep.subr.mxu0 0.0
        %967 = vmatpush1.msra.mxu0 0.0
        %968 = vmatprep.subr.mxu0 0.0
        %969 = vmatpush1.msra.mxu0 0.0
        %970 = vmatprep.subr.mxu0 0.0
        %971 = vmatpush1.msra.mxu0 0.0
        %972 = vmatprep.subr.mxu0 0.0
        %973 = vmatpush1.msra.mxu0 0.0
        %974 = vmatprep.subr.mxu0 0.0
        %975 = vmatpush1.msra.mxu0 0.0
        %976 = vmatprep.subr.mxu0 0.0
        %977 = vmatpush1.msra.mxu0 0.0
        %978 = vmatprep.subr.mxu0 0.0
        %979 = vmatpush1.msra.mxu0 0.0
        %980 = vmatprep.subr.mxu0 0.0
        %981 = vmatpush1.msra.mxu0 0.0
        %982 = vmatprep.subr.mxu0 0.0
        %983 = vmatpush1.msra.mxu0 0.0
        %984 = vmatprep.subr.mxu0 0.0
        %985 = vmatpush1.msra.mxu0 0.0
        %986 = vmatprep.subr.mxu0 0.0
        %987 = vmatpush1.msra.mxu0 0.0
        %988 = vmatprep.subr.mxu0 0.0
        %989 = vmatpush1.msra.mxu0 0.0
        %990 = vmatprep.subr.mxu0 0.0
        %991 = vmatpush1.msra.mxu0 0.0
        %992 = vmatprep.subr.mxu0 0.0
        %993 = vmatpush1.msra.mxu0 0.0
        %994 = vmatprep.subr.mxu0 0.0
        %995 = vmatpush1.msra.mxu0 0.0
        %996 = vmatprep.subr.mxu0 0.0
        %997 = vmatpush1.msra.mxu0 0.0
        %998 = vmatprep.mubr.f32.mxu0 0.0
        %999 = vmatmul.mubr.f32.gmra.mrb[0].mxu0 %v929
        %v1000 = vpop.f32.mrb[0].mxu0
        %v1001 = vadd.f32 %v925, %v1000
        %v1002 = vpop.f32.mrb[0].mxu0
        %1003 = vmatprep.mubr.f32.mxu0 0.0
        %1004 = vmatmul.mubr.f32.gmra.mrb[0].mxu0 %v932
        %v1005 = vpop.f32.mrb[0].mxu0
        %v1006 = vadd.f32 %v925, %v1005
        %v1007 = vpop.f32.mrb[0].mxu0
        %1008 = vdwg.mxu0
        %v1009 = vld [vmem:[%s619] sm:$0xff]
        %v1010 = vld [vmem:[%s619 + $0x8] sm:$0xff]
        %v1011 = vld [vmem:[%s619 + $0x10] sm:$0xff]
        %v1012 = vld [vmem:[%s619 + $0x18] sm:$0xff]
        %v1013 = vld [vmem:[%s619 + $0x20] sm:$0xff]
        %v1014 = vld [vmem:[%s619 + $0x28] sm:$0xff]
        %v1015 = vld [vmem:[%s619 + $0x30] sm:$0xff]
        %v1016 = vld [vmem:[%s619 + $0x38] sm:$0xff]
        %v1017 = vld [vmem:[%s619 + $0x40] sm:$0xff]
        %v1018 = vld [vmem:[%s619 + $0x48] sm:$0xff]
        %v1019 = vld [vmem:[%s721] sm:$0x1]
        %v1021 = vlaneseq
        %v1022 = vshrl.u32 %v1021, 7
        %v1023 = vsub.s32 0, %v1022
        %v1024 = vrot.slane %v1019, %v1023
        %1026 = vmatprep.subr.mxu0 0.0
        %1027 = vmatpush1.msra.mxu0 %v1009
        %1028 = vmatprep.subr.mxu0 0.0
        %1029 = vmatpush1.msra.mxu0 %v1010
        %1030 = vmatprep.subr.mxu0 0.0
        %1031 = vmatpush1.msra.mxu0 %v1011
        %1032 = vmatprep.subr.mxu0 0.0
        %1033 = vmatpush1.msra.mxu0 %v1012
        %1034 = vmatprep.subr.mxu0 0.0
        %1035 = vmatpush1.msra.mxu0 %v1013
        %1036 = vmatprep.subr.mxu0 0.0
        %1037 = vmatpush1.msra.mxu0 %v1014
        %1038 = vmatprep.subr.mxu0 0.0
        %1039 = vmatpush1.msra.mxu0 %v1015
        %1040 = vmatprep.subr.mxu0 0.0
        %1041 = vmatpush1.msra.mxu0 %v1016
        %1042 = vmatprep.subr.mxu0 0.0
        %1043 = vmatpush1.msra.mxu0 %v1017
        %1044 = vmatprep.subr.mxu0 0.0
        %1045 = vmatpush1.msra.mxu0 %v1018
        %1046 = vmatprep.subr.mxu0 0.0
        %1047 = vmatpush1.msra.mxu0 0.0
        %1048 = vmatprep.subr.mxu0 0.0
        %1049 = vmatpush1.msra.mxu0 0.0
        %1050 = vmatprep.subr.mxu0 0.0
        %1051 = vmatpush1.msra.mxu0 0.0
        %1052 = vmatprep.subr.mxu0 0.0
        %1053 = vmatpush1.msra.mxu0 0.0
        %1054 = vmatprep.subr.mxu0 0.0
        %1055 = vmatpush1.msra.mxu0 0.0
        %1056 = vmatprep.subr.mxu0 0.0
        %1057 = vmatpush1.msra.mxu0 0.0
        %1058 = vmatprep.subr.mxu0 0.0
        %1059 = vmatpush1.msra.mxu0 0.0
        %1060 = vmatprep.subr.mxu0 0.0
        %1061 = vmatpush1.msra.mxu0 0.0
        %1062 = vmatprep.subr.mxu0 0.0
        %1063 = vmatpush1.msra.mxu0 0.0
        %1064 = vmatprep.subr.mxu0 0.0
        %1065 = vmatpush1.msra.mxu0 0.0
        %1066 = vmatprep.subr.mxu0 0.0
        %1067 = vmatpush1.msra.mxu0 0.0
        %1068 = vmatprep.subr.mxu0 0.0
        %1069 = vmatpush1.msra.mxu0 0.0
        %1070 = vmatprep.subr.mxu0 0.0
        %1071 = vmatpush1.msra.mxu0 0.0
        %1072 = vmatprep.subr.mxu0 0.0
        %1073 = vmatpush1.msra.mxu0 0.0
        %1074 = vmatprep.subr.mxu0 0.0
        %1075 = vmatpush1.msra.mxu0 0.0
        %1076 = vmatprep.subr.mxu0 0.0
        %1077 = vmatpush1.msra.mxu0 0.0
        %1078 = vmatprep.subr.mxu0 0.0
        %1079 = vmatpush1.msra.mxu0 0.0
        %1080 = vmatprep.subr.mxu0 0.0
        %1081 = vmatpush1.msra.mxu0 0.0
        %1082 = vmatprep.subr.mxu0 0.0
        %1083 = vmatpush1.msra.mxu0 0.0
        %1084 = vmatprep.subr.mxu0 0.0
        %1085 = vmatpush1.msra.mxu0 0.0
        %1086 = vmatprep.subr.mxu0 0.0
        %1087 = vmatpush1.msra.mxu0 0.0
        %1088 = vmatprep.subr.mxu0 0.0
        %1089 = vmatpush1.msra.mxu0 0.0
        %1090 = vmatprep.mubr.f32.mxu0 0.0
        %1091 = vmatmul.mubr.f32.gmra.mrb[0].mxu0 %v929
        %v1092 = vpop.f32.mrb[0].mxu0
        %v1093 = vadd.f32 %v1024, %v1092
        %v1094 = vpop.f32.mrb[0].mxu0
        %1095 = vmatprep.mubr.f32.mxu0 0.0
        %1096 = vmatmul.mubr.f32.gmra.mrb[0].mxu0 %v932
        %v1097 = vpop.f32.mrb[0].mxu0
        %v1098 = vadd.f32 %v1024, %v1097
        %v1099 = vpop.f32.mrb[0].mxu0
        %1100 = vdwg.mxu0
        %v1101 = vtanh.pop %v1001
        %v1102 = vtanh.pop %v1006
        %v1103 = vxor.u32 %v1093, 2147483648
        %v1104 = vxor.u32 %v1098, 2147483648
        %v1105 = vmul.f32 %v1103, 1.442695
        %v1106 = vpow.pop %v1105
        %v1107 = vmul.f32 %v1104, 1.442695
        %v1108 = vpow.pop %v1107
        %v1109 = vadd.f32 %v1106, 1.0
        %v1110 = vadd.f32 %v1108, 1.0
        %v1111 = vrcp.pop %v1109
        %v1112 = vmul.f32 1.0, %v1111
        %v1113 = vrcp.pop %v1110
        %v1114 = vmul.f32 1.0, %v1113
        %v1115 = vmul.f32 %v1101, %v1112
        %v1116 = vmul.f32 %v1102, %v1114
        %p1117 = scmp.lt.s32.totalorder %s50, 3
        // Predicated region
        $region101: #{_lambda_.1} parent=83 // pred_check
          %p1118 = pneg %p1117
        $region102: #{_lambda_.1} parent=83 // pred_check_branch
          %1120 = sbr.rel (%p1118) target = $region104
        $region103: #{_lambda_.1} parent=83 // pred_region
          %v1121 = vld [vmem:[%s726] sm:$0xff]
          %v1122 = vld [vmem:[%s726 + $0x8] sm:$0xff]
          %v1123 = vld [vmem:[%s729] sm:$0x1]
          %v1125 = vlaneseq
          %v1126 = vshrl.u32 %v1125, 7
          %v1127 = vsub.s32 0, %v1126
          %v1128 = vrot.slane %v1123, %v1127
          %v1131 = vsel %vm898, %v1115, 0
          %v1134 = vsel %vm898, %v1116, 0
          %1136 = vmatprep.subr.mxu0 0.0
          %1137 = vmatpush1.msra.mxu0 %v1121
          %1138 = vmatprep.subr.mxu0 0.0
          %1139 = vmatpush1.msra.mxu0 %v1122
          %1140 = vmatprep.subr.mxu0 0.0
          %1141 = vmatpush1.msra.mxu0 0.0
          %1142 = vmatprep.subr.mxu0 0.0
          %1143 = vmatpush1.msra.mxu0 0.0
          %1144 = vmatprep.subr.mxu0 0.0
          %1145 = vmatpush1.msra.mxu0 0.0
          %1146 = vmatprep.subr.mxu0 0.0
          %1147 = vmatpush1.msra.mxu0 0.0
          %1148 = vmatprep.subr.mxu0 0.0
          %1149 = vmatpush1.msra.mxu0 0.0
          %1150 = vmatprep.subr.mxu0 0.0
          %1151 = vmatpush1.msra.mxu0 0.0
          %1152 = vmatprep.subr.mxu0 0.0
          %1153 = vmatpush1.msra.mxu0 0.0
          %1154 = vmatprep.subr.mxu0 0.0
          %1155 = vmatpush1.msra.mxu0 0.0
          %1156 = vmatprep.subr.mxu0 0.0
          %1157 = vmatpush1.msra.mxu0 0.0
          %1158 = vmatprep.subr.mxu0 0.0
          %1159 = vmatpush1.msra.mxu0 0.0
          %1160 = vmatprep.subr.mxu0 0.0
          %1161 = vmatpush1.msra.mxu0 0.0
          %1162 = vmatprep.subr.mxu0 0.0
          %1163 = vmatpush1.msra.mxu0 0.0
          %1164 = vmatprep.subr.mxu0 0.0
          %1165 = vmatpush1.msra.mxu0 0.0
          %1166 = vmatprep.subr.mxu0 0.0
          %1167 = vmatpush1.msra.mxu0 0.0
          %1168 = vmatprep.subr.mxu0 0.0
          %1169 = vmatpush1.msra.mxu0 0.0
          %1170 = vmatprep.subr.mxu0 0.0
          %1171 = vmatpush1.msra.mxu0 0.0
          %1172 = vmatprep.subr.mxu0 0.0
          %1173 = vmatpush1.msra.mxu0 0.0
          %1174 = vmatprep.subr.mxu0 0.0
          %1175 = vmatpush1.msra.mxu0 0.0
          %1176 = vmatprep.subr.mxu0 0.0
          %1177 = vmatpush1.msra.mxu0 0.0
          %1178 = vmatprep.subr.mxu0 0.0
          %1179 = vmatpush1.msra.mxu0 0.0
          %1180 = vmatprep.subr.mxu0 0.0
          %1181 = vmatpush1.msra.mxu0 0.0
          %1182 = vmatprep.subr.mxu0 0.0
          %1183 = vmatpush1.msra.mxu0 0.0
          %1184 = vmatprep.subr.mxu0 0.0
          %1185 = vmatpush1.msra.mxu0 0.0
          %1186 = vmatprep.subr.mxu0 0.0
          %1187 = vmatpush1.msra.mxu0 0.0
          %1188 = vmatprep.subr.mxu0 0.0
          %1189 = vmatpush1.msra.mxu0 0.0
          %1190 = vmatprep.subr.mxu0 0.0
          %1191 = vmatpush1.msra.mxu0 0.0
          %1192 = vmatprep.subr.mxu0 0.0
          %1193 = vmatpush1.msra.mxu0 0.0
          %1194 = vmatprep.subr.mxu0 0.0
          %1195 = vmatpush1.msra.mxu0 0.0
          %1196 = vmatprep.subr.mxu0 0.0
          %1197 = vmatpush1.msra.mxu0 0.0
          %1198 = vmatprep.subr.mxu0 0.0
          %1199 = vmatpush1.msra.mxu0 0.0
          %1200 = vmatprep.mubr.f32.mxu0 0.0
          %1201 = vmatmul.mubr.f32.gmra.mrb[0].mxu0 %v1131
          %v1202 = vpop.f32.mrb[0].mxu0
          %v1203 = vadd.f32 %v1128, %v1202
          %v1204 = vpop.f32.mrb[0].mxu0
          %1205 = vmatprep.mubr.f32.mxu0 0.0
          %1206 = vmatmul.mubr.f32.gmra.mrb[0].mxu0 %v1134
          %v1207 = vpop.f32.mrb[0].mxu0
          %v1208 = vadd.f32 %v1128, %v1207
          %v1209 = vpop.f32.mrb[0].mxu0
          %1210 = vdwg.mxu0
          %v1211 = vld [vmem:[#allocation2 + $0x8] sm:$0xff]
          %v1212 = vld [vmem:[#allocation2 + $0x10] sm:$0xff]
          %v1213 = vadd.f32 %v1211, %v1203
          %v1214 = vadd.f32 %v1212, %v1208
          %v1215 = vmul.f32 %v1213, %v749
          %v1216 = vmul.f32 %v1214, %v750
          %1217 = vst.msk [vmem:[#allocation2 + $0x8] sm:$0xff] %vm898, %v1215
          %1218 = vst.msk [vmem:[#allocation2 + $0x10] sm:$0xff] %vm898, %v1216
        $region104: #{_lambda_.1} parent=83 // pred_fallthru
          _
        %v1219 = vld [vmem:[#allocation3] sm:$0xff]
        %v1220 = vld [vmem:[#allocation3 + $0x8] sm:$0xff]
        %v1221 = vld [vmem:[%s734] sm:$0xff]
        %v1222 = vld [vmem:[%s734 + $0x8] sm:$0xff]
        %v1224 = vsel %vm898, %v1115, 0
        %v1227 = vsel %vm898, %v1116, 0
        %1229 = vmatprep.subr.mxu0 0.0
        %1230 = vmatpush1.msra.mxu0 %v1221
        %1231 = vmatprep.subr.mxu0 0.0
        %1232 = vmatpush1.msra.mxu0 %v1222
        %1233 = vmatprep.subr.mxu0 0.0
        %1234 = vmatpush1.msra.mxu0 0.0
        %1235 = vmatprep.subr.mxu0 0.0
        %1236 = vmatpush1.msra.mxu0 0.0
        %1237 = vmatprep.subr.mxu0 0.0
        %1238 = vmatpush1.msra.mxu0 0.0
        %1239 = vmatprep.subr.mxu0 0.0
        %1240 = vmatpush1.msra.mxu0 0.0
        %1241 = vmatprep.subr.mxu0 0.0
        %1242 = vmatpush1.msra.mxu0 0.0
        %1243 = vmatprep.subr.mxu0 0.0
        %1244 = vmatpush1.msra.mxu0 0.0
        %1245 = vmatprep.subr.mxu0 0.0
        %1246 = vmatpush1.msra.mxu0 0.0
        %1247 = vmatprep.subr.mxu0 0.0
        %1248 = vmatpush1.msra.mxu0 0.0
        %1249 = vmatprep.subr.mxu0 0.0
        %1250 = vmatpush1.msra.mxu0 0.0
        %1251 = vmatprep.subr.mxu0 0.0
        %1252 = vmatpush1.msra.mxu0 0.0
        %1253 = vmatprep.subr.mxu0 0.0
        %1254 = vmatpush1.msra.mxu0 0.0
        %1255 = vmatprep.subr.mxu0 0.0
        %1256 = vmatpush1.msra.mxu0 0.0
        %1257 = vmatprep.subr.mxu0 0.0
        %1258 = vmatpush1.msra.mxu0 0.0
        %1259 = vmatprep.subr.mxu0 0.0
        %1260 = vmatpush1.msra.mxu0 0.0
        %1261 = vmatprep.subr.mxu0 0.0
        %1262 = vmatpush1.msra.mxu0 0.0
        %1263 = vmatprep.subr.mxu0 0.0
        %1264 = vmatpush1.msra.mxu0 0.0
        %1265 = vmatprep.subr.mxu0 0.0
        %1266 = vmatpush1.msra.mxu0 0.0
        %1267 = vmatprep.subr.mxu0 0.0
        %1268 = vmatpush1.msra.mxu0 0.0
        %1269 = vmatprep.subr.mxu0 0.0
        %1270 = vmatpush1.msra.mxu0 0.0
        %1271 = vmatprep.subr.mxu0 0.0
        %1272 = vmatpush1.msra.mxu0 0.0
        %1273 = vmatprep.subr.mxu0 0.0
        %1274 = vmatpush1.msra.mxu0 0.0
        %1275 = vmatprep.subr.mxu0 0.0
        %1276 = vmatpush1.msra.mxu0 0.0
        %1277 = vmatprep.subr.mxu0 0.0
        %1278 = vmatpush1.msra.mxu0 0.0
        %1279 = vmatprep.subr.mxu0 0.0
        %1280 = vmatpush1.msra.mxu0 0.0
        %1281 = vmatprep.subr.mxu0 0.0
        %1282 = vmatpush1.msra.mxu0 0.0
        %1283 = vmatprep.subr.mxu0 0.0
        %1284 = vmatpush1.msra.mxu0 0.0
        %1285 = vmatprep.subr.mxu0 0.0
        %1286 = vmatpush1.msra.mxu0 0.0
        %1287 = vmatprep.subr.mxu0 0.0
        %1288 = vmatpush1.msra.mxu0 0.0
        %1289 = vmatprep.subr.mxu0 0.0
        %1290 = vmatpush1.msra.mxu0 0.0
        %1291 = vmatprep.subr.mxu0 0.0
        %1292 = vmatpush1.msra.mxu0 0.0
        %1293 = vmatprep.mubr.f32.mxu0 0.0
        %1294 = vmatmul.mubr.f32.gmra.mrb[0].mxu0 %v1224
        %v1295 = vpop.f32.mrb[0].mxu0
        %v1296 = vadd.f32 0.0, %v1295
        %v1297 = vpop.f32.mrb[0].mxu0
        %1298 = vmatprep.mubr.f32.mxu0 0.0
        %1299 = vmatmul.mubr.f32.gmra.mrb[0].mxu0 %v1227
        %v1300 = vpop.f32.mrb[0].mxu0
        %v1301 = vadd.f32 0.0, %v1300
        %v1302 = vpop.f32.mrb[0].mxu0
        %1303 = vdwg.mxu0
        %v1304 = vadd.f32 %v1219, %v1296
        %v1305 = vadd.f32 %v1220, %v1301
        %1306 = vst.msk [vmem:[#allocation3] sm:$0xff] %vm898, %v1304
        %1307 = vst.msk [vmem:[#allocation3 + $0x8] sm:$0xff] %vm898, %v1305
        %p1308 = scmp.eq.s32.totalorder %s50, 3
        // Predicated region
        $region105: #{_lambda_.1} parent=83 // pred_check
          %p1309 = pneg %p1308
        $region106: #{_lambda_.1} parent=83 // pred_check_branch
          %1311 = sbr.rel (%p1309) target = $region108
        $region107: #{_lambda_.1} parent=83 // pred_region
          %v1312 = vld [vmem:[#allocation3] sm:$0xff]
          %v1313 = vld [vmem:[#allocation3 + $0x8] sm:$0xff]
          %v1314 = vld [vmem:[%s13] sm:$0x1]
          %v1316 = vlaneseq
          %v1317 = vshrl.u32 %v1316, 7
          %v1318 = vsub.s32 0, %v1317
          %v1319 = vrot.slane %v1314, %v1318
          %v1321 = vadd.f32 %v1312, %v1319
          %v1322 = vadd.f32 %v1313, %v1319
          %v1323 = vmul.f32 %v1321, %v749
          %v1324 = vmul.f32 %v1322, %v750
          %v1325 = vld [vmem:[%s14] sm:$0xff]
          %v1326 = vld [vmem:[%s14 + $0x8] sm:$0xff]
          %v1327 = vld [vmem:[#allocation11] sm:$0x1]
          %v1329 = vlaneseq
          %v1330 = vshrl.u32 %v1329, 7
          %v1331 = vsub.s32 0, %v1330
          %v1332 = vrot.slane %v1327, %v1331
          %v1335 = vsel %vm898, %v1323, 0
          %v1338 = vsel %vm898, %v1324, 0
          %1340 = vmatprep.subr.mxu0 0.0
          %1341 = vmatpush1.msra.mxu0 %v1325
          %1342 = vmatprep.subr.mxu0 0.0
          %1343 = vmatpush1.msra.mxu0 %v1326
          %1344 = vmatprep.subr.mxu0 0.0
          %1345 = vmatpush1.msra.mxu0 0.0
          %1346 = vmatprep.subr.mxu0 0.0
          %1347 = vmatpush1.msra.mxu0 0.0
          %1348 = vmatprep.subr.mxu0 0.0
          %1349 = vmatpush1.msra.mxu0 0.0
          %1350 = vmatprep.subr.mxu0 0.0
          %1351 = vmatpush1.msra.mxu0 0.0
          %1352 = vmatprep.subr.mxu0 0.0
          %1353 = vmatpush1.msra.mxu0 0.0
          %1354 = vmatprep.subr.mxu0 0.0
          %1355 = vmatpush1.msra.mxu0 0.0
          %1356 = vmatprep.subr.mxu0 0.0
          %1357 = vmatpush1.msra.mxu0 0.0
          %1358 = vmatprep.subr.mxu0 0.0
          %1359 = vmatpush1.msra.mxu0 0.0
          %1360 = vmatprep.subr.mxu0 0.0
          %1361 = vmatpush1.msra.mxu0 0.0
          %1362 = vmatprep.subr.mxu0 0.0
          %1363 = vmatpush1.msra.mxu0 0.0
          %1364 = vmatprep.subr.mxu0 0.0
          %1365 = vmatpush1.msra.mxu0 0.0
          %1366 = vmatprep.subr.mxu0 0.0
          %1367 = vmatpush1.msra.mxu0 0.0
          %1368 = vmatprep.subr.mxu0 0.0
          %1369 = vmatpush1.msra.mxu0 0.0
          %1370 = vmatprep.subr.mxu0 0.0
          %1371 = vmatpush1.msra.mxu0 0.0
          %1372 = vmatprep.subr.mxu0 0.0
          %1373 = vmatpush1.msra.mxu0 0.0
          %1374 = vmatprep.subr.mxu0 0.0
          %1375 = vmatpush1.msra.mxu0 0.0
          %1376 = vmatprep.subr.mxu0 0.0
          %1377 = vmatpush1.msra.mxu0 0.0
          %1378 = vmatprep.subr.mxu0 0.0
          %1379 = vmatpush1.msra.mxu0 0.0
          %1380 = vmatprep.subr.mxu0 0.0
          %1381 = vmatpush1.msra.mxu0 0.0
          %1382 = vmatprep.subr.mxu0 0.0
          %1383 = vmatpush1.msra.mxu0 0.0
          %1384 = vmatprep.subr.mxu0 0.0
          %1385 = vmatpush1.msra.mxu0 0.0
          %1386 = vmatprep.subr.mxu0 0.0
          %1387 = vmatpush1.msra.mxu0 0.0
          %1388 = vmatprep.subr.mxu0 0.0
          %1389 = vmatpush1.msra.mxu0 0.0
          %1390 = vmatprep.subr.mxu0 0.0
          %1391 = vmatpush1.msra.mxu0 0.0
          %1392 = vmatprep.subr.mxu0 0.0
          %1393 = vmatpush1.msra.mxu0 0.0
          %1394 = vmatprep.subr.mxu0 0.0
          %1395 = vmatpush1.msra.mxu0 0.0
          %1396 = vmatprep.subr.mxu0 0.0
          %1397 = vmatpush1.msra.mxu0 0.0
          %1398 = vmatprep.subr.mxu0 0.0
          %1399 = vmatpush1.msra.mxu0 0.0
          %1400 = vmatprep.subr.mxu0 0.0
          %1401 = vmatpush1.msra.mxu0 0.0
          %1402 = vmatprep.subr.mxu0 0.0
          %1403 = vmatpush1.msra.mxu0 0.0
          %1404 = vmatprep.mubr.f32.mxu0 0.0
          %1405 = vmatmul.mubr.f32.gmra.mrb[0].mxu0 %v1335
          %v1406 = vpop.f32.mrb[0].mxu0
          %v1407 = vadd.f32 %v1332, %v1406
          %v1408 = vpop.f32.mrb[0].mxu0
          %1409 = vmatprep.mubr.f32.mxu0 0.0
          %1410 = vmatmul.mubr.f32.gmra.mrb[0].mxu0 %v1338
          %v1411 = vpop.f32.mrb[0].mxu0
          %v1412 = vadd.f32 %v1332, %v1411
          %v1413 = vpop.f32.mrb[0].mxu0
          %1414 = vdwg.mxu0
          %v1415 = vmul.f32 %v1407, %v749
          %v1416 = vmul.f32 %v1412, %v750
          %v1417 = vld [vmem:[%s16] sm:$0xff]
          %v1418 = vld [vmem:[%s16 + $0x8] sm:$0xff]
          %v1419 = vld [vmem:[%s17] sm:$0x1]
          %v1421 = vlaneseq
          %v1422 = vshrl.u32 %v1421, 7
          %v1423 = vsub.s32 0, %v1422
          %v1424 = vrot.slane %v1419, %v1423
          %1426 = vmatprep.subr.mxu0 0.0
          %1427 = vmatpush1.msra.mxu0 %v1417
          %1428 = vmatprep.subr.mxu0 0.0
          %1429 = vmatpush1.msra.mxu0 %v1418
          %1430 = vmatprep.subr.mxu0 0.0
          %1431 = vmatpush1.msra.mxu0 0.0
          %1432 = vmatprep.subr.mxu0 0.0
          %1433 = vmatpush1.msra.mxu0 0.0
          %1434 = vmatprep.subr.mxu0 0.0
          %1435 = vmatpush1.msra.mxu0 0.0
          %1436 = vmatprep.subr.mxu0 0.0
          %1437 = vmatpush1.msra.mxu0 0.0
          %1438 = vmatprep.subr.mxu0 0.0
          %1439 = vmatpush1.msra.mxu0 0.0
          %1440 = vmatprep.subr.mxu0 0.0
          %1441 = vmatpush1.msra.mxu0 0.0
          %1442 = vmatprep.subr.mxu0 0.0
          %1443 = vmatpush1.msra.mxu0 0.0
          %1444 = vmatprep.subr.mxu0 0.0
          %1445 = vmatpush1.msra.mxu0 0.0
          %1446 = vmatprep.subr.mxu0 0.0
          %1447 = vmatpush1.msra.mxu0 0.0
          %1448 = vmatprep.subr.mxu0 0.0
          %1449 = vmatpush1.msra.mxu0 0.0
          %1450 = vmatprep.subr.mxu0 0.0
          %1451 = vmatpush1.msra.mxu0 0.0
          %1452 = vmatprep.subr.mxu0 0.0
          %1453 = vmatpush1.msra.mxu0 0.0
          %1454 = vmatprep.subr.mxu0 0.0
          %1455 = vmatpush1.msra.mxu0 0.0
          %1456 = vmatprep.subr.mxu0 0.0
          %1457 = vmatpush1.msra.mxu0 0.0
          %1458 = vmatprep.subr.mxu0 0.0
          %1459 = vmatpush1.msra.mxu0 0.0
          %1460 = vmatprep.subr.mxu0 0.0
          %1461 = vmatpush1.msra.mxu0 0.0
          %1462 = vmatprep.subr.mxu0 0.0
          %1463 = vmatpush1.msra.mxu0 0.0
          %1464 = vmatprep.subr.mxu0 0.0
          %1465 = vmatpush1.msra.mxu0 0.0
          %1466 = vmatprep.subr.mxu0 0.0
          %1467 = vmatpush1.msra.mxu0 0.0
          %1468 = vmatprep.subr.mxu0 0.0
          %1469 = vmatpush1.msra.mxu0 0.0
          %1470 = vmatprep.subr.mxu0 0.0
          %1471 = vmatpush1.msra.mxu0 0.0
          %1472 = vmatprep.subr.mxu0 0.0
          %1473 = vmatpush1.msra.mxu0 0.0
          %1474 = vmatprep.subr.mxu0 0.0
          %1475 = vmatpush1.msra.mxu0 0.0
          %1476 = vmatprep.subr.mxu0 0.0
          %1477 = vmatpush1.msra.mxu0 0.0
          %1478 = vmatprep.subr.mxu0 0.0
          %1479 = vmatpush1.msra.mxu0 0.0
          %1480 = vmatprep.subr.mxu0 0.0
          %1481 = vmatpush1.msra.mxu0 0.0
          %1482 = vmatprep.subr.mxu0 0.0
          %1483 = vmatpush1.msra.mxu0 0.0
          %1484 = vmatprep.subr.mxu0 0.0
          %1485 = vmatpush1.msra.mxu0 0.0
          %1486 = vmatprep.subr.mxu0 0.0
          %1487 = vmatpush1.msra.mxu0 0.0
          %1488 = vmatprep.subr.mxu0 0.0
          %1489 = vmatpush1.msra.mxu0 0.0
          %1490 = vmatprep.mubr.f32.mxu0 0.0
          %1491 = vmatmul.mubr.f32.gmra.mrb[0].mxu0 %v1335
          %v1492 = vpop.f32.mrb[0].mxu0
          %v1493 = vadd.f32 %v1424, %v1492
          %v1494 = vpop.f32.mrb[0].mxu0
          %1495 = vmatprep.mubr.f32.mxu0 0.0
          %1496 = vmatmul.mubr.f32.gmra.mrb[0].mxu0 %v1338
          %v1497 = vpop.f32.mrb[0].mxu0
          %v1498 = vadd.f32 %v1424, %v1497
          %v1499 = vpop.f32.mrb[0].mxu0
          %1500 = vdwg.mxu0
          %v1501 = vmul.f32 %v1493, %v749
          %v1502 = vmul.f32 %v1498, %v750
          %v1503 = vld [vmem:[%s715] sm:$0xff]
          %v1504 = vld [vmem:[%s715 + $0x8] sm:$0xff]
          %v1505 = vmul.f32 %v1501, 1.442695
          %v1506 = vpow.pop %v1505
          %v1507 = vmul.f32 %v1502, 1.442695
          %v1508 = vpow.pop %v1507
          %v1509 = vmul.f32 %v1503, %v1506
          %v1510 = vmul.f32 %v1504, %v1508
          %v1511 = vadd.f32 %v1415, %v1509
          %v1512 = vadd.f32 %v1416, %v1510
          %v1513 = vmul.f32 %v1511, %v749
          %v1514 = vmul.f32 %v1512, %v750
          %1517 = vrot.lane.b32.xlu0 %v1415, 4
          %v1518 = vpop.permute.xlu0 %1517
          %1519 = vrot.lane.b32.xlu0 %v1416, 4
          %v1520 = vpop.permute.xlu0 %1519
          %1525 = vrot.lane.b32.xlu0 %v1501, 8
          %v1526 = vpop.permute.xlu0 %1525
          %1527 = vrot.lane.b32.xlu0 %v1502, 8
          %v1528 = vpop.permute.xlu0 %1527
          %vm1531 = vcmask 31744
          %v1532 = vsel %vm1531, %v1513, %v1518
          %v1533 = vsel %vm1531, %v1514, %v1520
          %vm1534 = vcmask 64512
          %v1535 = vsel %vm1534, %v1532, %v1526
          %v1536 = vsel %vm1534, %v1533, %v1528
          %vm1537 = vcmask 97280
          %1538 = vst.msk [vmem:[%s739] sm:$0xff] %vm1537, %v1535
          %1539 = vst.msk [vmem:[%s739 + $0x8] sm:$0xff] %vm1537, %v1536
        $region108: #{_lambda_.1} parent=83 // pred_fallthru
          _
        %p1540 = scmp.lt.s32.totalorder %s49, 1
        %s1541 = scalar_select %p1540, %s49, 1
        %s1542 = smul.addr %s1541, 2
        %s1543 = smul.addr %s1542, 8
        %s1544 = scalar_lea.vmem %s18, %s1543
        // Predicated region
        $region109: #{_lambda_.1} parent=83 // pred_check
          %p1545 = pneg %p456
        $region110: #{_lambda_.1} parent=83 // pred_check_branch
          %1547 = sbr.rel (%p1545) target = $region112
        $region111: #{_lambda_.1} parent=83 // pred_region
          _
        $region112: #{_lambda_.1} parent=83 // pred_fallthru
          _
      $region84: #{_lambda_.1} parent=5 // pred_fallthru
        _
      %p1548 = scmp.le.s32.totalorder 2, %s40
      // Predicated region
      $region113: #{_lambda_.1} parent=5 // pred_check
        %p1549 = pneg %p1548
      $region114: #{_lambda_.1} parent=5 // pred_check_branch
        %1551 = sbr.rel (%p1549) target = $region116
      $region115: #{_lambda_.1} parent=5 // pred_region
        %s1552 = ssub.s32 %s40, 2
        // Predicated region
        $region117: #{_lambda_.1} parent=115 // pred_check
          %p1553 = pneg %p462
        $region118: #{_lambda_.1} parent=115 // pred_check_branch
          %1555 = sbr.rel (%p1553) target = $region120
        $region119: #{_lambda_.1} parent=115 // pred_region
          %p1556 = scmp.lt.s32.totalorder %s51, 1
          %s1557 = scalar_select %p1556, %s51, 1
          %s1558 = smul.addr %s1557, 2
          %s1559 = smul.addr %s1558, 8
          %s1560 = scalar_lea.vmem %s18, %s1559
        $region120: #{_lambda_.1} parent=115 // pred_fallthru
          _
      $region116: #{_lambda_.1} parent=5 // pred_fallthru
        _
    $region6: #{_lambda_.1} parent=1 // loop_footer
      %s44 = sadd.s32 1, %s40
    $region7: #{_lambda_.1} parent=1 // loop_footer_branch
      %39 = sbr.rel target = $region3
    $region8: #{_lambda_.1} parent=1 // loop_exit
      _
    %1561 = vsyncpa [#allocation8], 1
    %s1562 = scalar_lea.sflag [#allocation8], 1
    %1563 = vsyncpa %s1562, 1
    %1564 = vsyncpa [#allocation10], 1
    %s1565 = scalar_lea.sflag [#allocation10], 1
    %1566 = vsyncpa %s1565, 1

</llo_original>
